<compile_context>
chip_gen: v5e
topology: v5e:2x2
jax: 0.10.0
libtpu: 0.0.40
codegen_flags: <defaults>
</compile_context>

<pallas_src>
import functools

import jax
import jax.numpy as jnp
from jax import lax
from jax.experimental import pallas as pl
from jax.experimental.pallas import tpu as pltpu

ALPHA = 0.1
BETA = 0.1
GAMMA = 0.5
EPS = float(jnp.finfo(jnp.float32).eps)  # matches torch.finfo(torch.float32).eps

_NUM_STATS = 7  # [tt, d1, d2, d3, e1, e2, e3]


def _make_stats_kernel(t_tile, tiles_per_split, total_t, need_mask):
    """Build the streaming-statistics kernel (static config baked in)."""

    def kernel(s1_ref, s2_ref, s3_ref, t_ref, out_ref,
               tt_acc, d1_acc, d2_acc, d3_acc, e1_acc, e2_acc, e3_acc):
        c = pl.program_id(0)   # core-split index ("parallel")
        k = pl.program_id(1)   # T-tile index within the split ("arbitrary")

        @pl.when(k == 0)
        def _init():
            z = jnp.zeros_like(tt_acc)
            tt_acc[...] = z
            d1_acc[...] = z
            d2_acc[...] = z
            d3_acc[...] = z
            e1_acc[...] = z
            e2_acc[...] = z
            e3_acc[...] = z

        # Load blocks (native dtype) and upcast; all accumulation in f32.
        t = t_ref[...].astype(jnp.float32)
        s1 = s1_ref[...].astype(jnp.float32)
        s2 = s2_ref[...].astype(jnp.float32)
        s3 = s3_ref[...].astype(jnp.float32)

        if need_mask:
            # Zero out lanes past the true sequence length T (covers the ragged
            # last tile and any duplicated/clamped tiles from the core split).
            g = c * tiles_per_split + k
            col = lax.broadcasted_iota(jnp.int32, t.shape, 1)
            valid = (g * t_tile + col) < total_t
            zero = jnp.zeros_like(t)
            t = jnp.where(valid, t, zero)
            s1 = jnp.where(valid, s1, zero)
            s2 = jnp.where(valid, s2, zero)
            s3 = jnp.where(valid, s3, zero)

        tt_acc[...] += jnp.sum(t * t, axis=-1, keepdims=True)
        d1_acc[...] += jnp.sum(s1 * t, axis=-1, keepdims=True)
        d2_acc[...] += jnp.sum(s2 * t, axis=-1, keepdims=True)
        d3_acc[...] += jnp.sum(s3 * t, axis=-1, keepdims=True)
        r1 = s1 - t
        r2 = s2 - t
        r3 = s3 - t
        e1_acc[...] += jnp.sum(r1 * r1, axis=-1, keepdims=True)
        e2_acc[...] += jnp.sum(r2 * r2, axis=-1, keepdims=True)
        e3_acc[...] += jnp.sum(r3 * r3, axis=-1, keepdims=True)

        @pl.when(k == pl.num_programs(1) - 1)
        def _write():
            # Write the 7 statistics columns for this split's output block.
            out_ref[0, :, 0:1] = tt_acc[...]
            out_ref[0, :, 1:2] = d1_acc[...]
            out_ref[0, :, 2:3] = d2_acc[...]
            out_ref[0, :, 3:4] = d3_acc[...]
            out_ref[0, :, 4:5] = e1_acc[...]
            out_ref[0, :, 5:6] = e2_acc[...]
            out_ref[0, :, 6:7] = e3_acc[...]

    return kernel


def _pick_t_tile(B, T, itemsize, max_tile_elems=None,
                 per_block_bytes=2 * 1024 * 1024):
    """Largest lane-dense (x128) tile keeping each input block <= ~2 MiB."""
    b_pad = max(8, ((B + 7) // 8) * 8)            # sublane-padded rows in VMEM
    tile = (per_block_bytes // (b_pad * itemsize)) // 128 * 128
    tile = max(tile, 128)
    t_ceil = pl.cdiv(T, 128) * 128                # never exceed what is needed
    tile = min(tile, t_ceil)
    if max_tile_elems is not None:
        tile = min(tile, max(128, (max_tile_elems // 128) * 128))
    return tile


def _compute_stats(s1, s2, s3, target_audio, max_tile_elems=None,
                   num_core_splits=2):
    """Pallas streaming reduction -> (B, 7) sufficient statistics."""
    B, T = target_audio.shape
    itemsize = jnp.dtype(target_audio.dtype).itemsize

    t_tile = _pick_t_tile(B, T, itemsize, max_tile_elems)
    n_tiles = pl.cdiv(T, t_tile)
    nc = num_core_splits if n_tiles >= num_core_splits else 1
    tpc = pl.cdiv(n_tiles, nc)                    # tiles per split
    need_mask = (nc * tpc * t_tile) != T

    def audio_idx(c, k):
        # Clamp so fully out-of-range tiles (odd splits) re-read a valid block;
        # the in-kernel mask zeroes their contribution.
        return (0, jnp.minimum(c * tpc + k, n_tiles - 1))

    audio_spec = pl.BlockSpec((B, t_tile), audio_idx)
    kernel = _make_stats_kernel(t_tile, tpc, T, need_mask)

    stats = pl.pallas_call(
        kernel,
        out_shape=jax.ShapeDtypeStruct((nc, B, _NUM_STATS), jnp.float32),
        grid_spec=pltpu.PrefetchScalarGridSpec(
            num_scalar_prefetch=0,
            grid=(nc, tpc),
            in_specs=[audio_spec, audio_spec, audio_spec, audio_spec],
            out_specs=pl.BlockSpec((1, B, _NUM_STATS), lambda c, k: (c, 0, 0)),
            scratch_shapes=[pltpu.VMEM((B, 1), jnp.float32)] * 7,
        ),
        compiler_params=pltpu.CompilerParams(
            dimension_semantics=("parallel", "arbitrary"),
            vmem_limit_bytes=32 * 1024 * 1024),
    )(s1, s2, s3, target_audio)

    return jnp.sum(stats, axis=0)  # (B, 7)


@functools.partial(jax.jit, static_argnames=("max_tile_elems",))
def spex_plus_loss(speaker_preds, speaker_id, s1, s2, s3, target_audio,
                   max_tile_elems=None):
    stats = _compute_stats(s1, s2, s3, target_audio, max_tile_elems)
    tt = stats[:, 0]

    def si_sdr_mean(dot, err):
        # torchmetrics SI-SDR (zero_mean=False) from sufficient statistics:
        #   a   = (sum(s*t) + eps) / (sum(t^2) + eps)
        #   num = a^2 * sum(t^2) + eps
        #   den = sum((a*t - s)^2) + eps
        #       = (a-1)^2*tt + 2*(a-1)*(tt - sum(s*t)) + sum((s-t)^2) + eps
        a = (dot + EPS) / (tt + EPS)
        num = a * a * tt + EPS
        den = (a - 1.0) * (a - 1.0) * tt + 2.0 * (a - 1.0) * (tt - dot) + err + EPS
        return jnp.mean(10.0 * jnp.log10(num / den))

    sd1 = si_sdr_mean(stats[:, 1], stats[:, 4])
    sd2 = si_sdr_mean(stats[:, 2], stats[:, 5])
    sd3 = si_sdr_mean(stats[:, 3], stats[:, 6])

    # Cross entropy (mean over batch) in plain XLA, per the perf review.
    logits = speaker_preds.astype(jnp.float32)
    logp = jax.nn.log_softmax(logits, axis=-1)
    labels = speaker_id.astype(jnp.int32)
    ce = -jnp.mean(jnp.take_along_axis(logp, labels[:, None], axis=-1))

    si_sdr_loss = -((1.0 - ALPHA - BETA) * sd1 + ALPHA * sd2 + BETA * sd3)
    return si_sdr_loss + GAMMA * ce


# ------------------------- pure-JAX reference (for checking) -------------------------

def _si_sdr_batch_mean_ref(s, t):
    dot = jnp.sum(s * t, axis=-1, keepdims=True)
    tt = jnp.sum(t * t, axis=-1, keepdims=True)
    a = (dot + EPS) / (tt + EPS)
    t_scaled = a * t
    noise = t_scaled - s
    num = jnp.sum(t_scaled * t_scaled, axis=-1, keepdims=True) + EPS
    den = jnp.sum(noise * noise, axis=-1, keepdims=True) + EPS
    return jnp.mean(10.0 * jnp.log10(num / den))


def _reference_loss(speaker_preds, speaker_id, s1, s2, s3, target_audio):
    logp = jax.nn.log_softmax(speaker_preds.astype(jnp.float32), axis=-1)
    ce = -jnp.mean(jnp.take_along_axis(logp, speaker_id[:, None], axis=-1))
    sd1 = _si_sdr_batch_mean_ref(s1, target_audio)
    sd2 = _si_sdr_batch_mean_ref(s2, target_audio)
    sd3 = _si_sdr_batch_mean_ref(s3, target_audio)
    return -((1.0 - ALPHA - BETA) * sd1 + ALPHA * sd2 + BETA * sd3) + GAMMA * ce


if __name__ == "__main__":
    key = jax.random.PRNGKey(0)
    k1, k2, k3, k4, k5, k6 = jax.random.split(key, 6)

    B, C, T = 4, 8, 4000  # T not a multiple of 128 -> exercises in-kernel tail masking
    speaker_preds = jax.random.normal(k1, (B, C), dtype=jnp.float32)
    speaker_id = jax.random.randint(k2, (B,), 0, C, dtype=jnp.int32)
    target_audio = jax.random.normal(k3, (B, T), dtype=jnp.float32)
    n1 = jax.random.normal(k4, (B, T), dtype=jnp.float32)
    n2 = jax.random.normal(k5, (B, T), dtype=jnp.float32)
    n3 = jax.random.normal(k6, (B, T), dtype=jnp.float32)
    s1 = target_audio + 0.10 * n1
    s2 = target_audio + 0.20 * n2
    s3 = target_audio + 0.30 * n3

    ref = _reference_loss(speaker_preds, speaker_id, s1, s2, s3, target_audio)

    # Default tiling: one big lane-dense tile, single grid step.
    loss = jax.block_until_ready(
        spex_plus_loss(speaker_preds, speaker_id, s1, s2, s3, target_audio))
    assert jnp.allclose(loss, ref, rtol=1e-4, atol=1e-4), (loss, ref)

    # Small-tile path: multi-tile grid + 2-way "parallel" split + tail masking.
    loss_small = jax.block_until_ready(
        spex_plus_loss(speaker_preds, speaker_id, s1, s2, s3, target_audio,
                       max_tile_elems=1024))
    assert jnp.allclose(loss_small, ref, rtol=1e-4, atol=1e-4), (loss_small, ref)

    # High-SI-SDR case (~50 dB): checks the better-conditioned denominator path.
    s_hi = target_audio + 3e-3 * n1
    ref_hi = _reference_loss(speaker_preds, speaker_id, s_hi, s_hi, s_hi, target_audio)
    loss_hi = jax.block_until_ready(
        spex_plus_loss(speaker_preds, speaker_id, s_hi, s_hi, s_hi, target_audio))
    assert jnp.allclose(loss_hi, ref_hi, rtol=1e-3, atol=3e-2), (loss_hi, ref_hi)

    print("KERNEL_OK")
</pallas_src>

<mosaic_0001>
module attributes {stable_mosaic.version = 11 : i64} {
  func.func @kernel(%arg0: i32, %arg1: i32, %arg2: memref<4x4096xf32, #tpu.memory_space<vmem>>, %arg3: memref<4x4096xf32, #tpu.memory_space<vmem>>, %arg4: memref<4x4096xf32, #tpu.memory_space<vmem>>, %arg5: memref<4x4096xf32, #tpu.memory_space<vmem>>, %arg6: memref<1x4x7xf32, #tpu.memory_space<vmem>>, %arg7: memref<4x1xf32, #tpu.memory_space<vmem>>, %arg8: memref<4x1xf32, #tpu.memory_space<vmem>>, %arg9: memref<4x1xf32, #tpu.memory_space<vmem>>, %arg10: memref<4x1xf32, #tpu.memory_space<vmem>>, %arg11: memref<4x1xf32, #tpu.memory_space<vmem>>, %arg12: memref<4x1xf32, #tpu.memory_space<vmem>>, %arg13: memref<4x1xf32, #tpu.memory_space<vmem>>) attributes {dimension_semantics = [#tpu.dimension_semantics<parallel>, #tpu.dimension_semantics<arbitrary>], iteration_bounds = array<i64: 1, 1>, scalar_prefetch = 0 : i64, scratch_operands = 7 : i64, tpu.core_type = #tpu.core_type<tc>, window_params = [{transform_indices = @transform_0, window_bounds = array<i64: 4, 4096>}, {transform_indices = @transform_1, window_bounds = array<i64: 4, 4096>}, {transform_indices = @transform_2, window_bounds = array<i64: 4, 4096>}, {transform_indices = @transform_3, window_bounds = array<i64: 4, 4096>}, {transform_indices = @transform_4, window_bounds = array<i64: 1, 4, 7>}]} {
    %c0_i32 = arith.constant 0 : i32
    %0 = arith.cmpi eq, %arg1, %c0_i32 : i32
    %1 = arith.extui %0 : i1 to i32
    %c0_i32_0 = arith.constant 0 : i32
    %2 = arith.cmpi ne, %1, %c0_i32_0 : i32
    scf.if %2 {
      %cst_45 = arith.constant 0.000000e+00 : f32
      %68 = vector.broadcast %cst_45 : f32 to vector<4x1xf32>
      %c0_46 = arith.constant 0 : index
      %c0_47 = arith.constant 0 : index
      %69 = vector.load %arg7[%c0_46, %c0_47] : memref<4x1xf32, #tpu.memory_space<vmem>>, vector<4x1xf32>
      tpu.vector_store %arg7[%c0_46, %c0_47], %68 {strides = array<i32>} : memref<4x1xf32, #tpu.memory_space<vmem>>, vector<4x1xf32>,
      %c0_48 = arith.constant 0 : index
      %c0_49 = arith.constant 0 : index
      %70 = vector.load %arg8[%c0_48, %c0_49] : memref<4x1xf32, #tpu.memory_space<vmem>>, vector<4x1xf32>
      tpu.vector_store %arg8[%c0_48, %c0_49], %68 {strides = array<i32>} : memref<4x1xf32, #tpu.memory_space<vmem>>, vector<4x1xf32>,
      %c0_50 = arith.constant 0 : index
      %c0_51 = arith.constant 0 : index
      %71 = vector.load %arg9[%c0_50, %c0_51] : memref<4x1xf32, #tpu.memory_space<vmem>>, vector<4x1xf32>
      tpu.vector_store %arg9[%c0_50, %c0_51], %68 {strides = array<i32>} : memref<4x1xf32, #tpu.memory_space<vmem>>, vector<4x1xf32>,
      %c0_52 = arith.constant 0 : index
      %c0_53 = arith.constant 0 : index
      %72 = vector.load %arg10[%c0_52, %c0_53] : memref<4x1xf32, #tpu.memory_space<vmem>>, vector<4x1xf32>
      tpu.vector_store %arg10[%c0_52, %c0_53], %68 {strides = array<i32>} : memref<4x1xf32, #tpu.memory_space<vmem>>, vector<4x1xf32>,
      %c0_54 = arith.constant 0 : index
      %c0_55 = arith.constant 0 : index
      %73 = vector.load %arg11[%c0_54, %c0_55] : memref<4x1xf32, #tpu.memory_space<vmem>>, vector<4x1xf32>
      tpu.vector_store %arg11[%c0_54, %c0_55], %68 {strides = array<i32>} : memref<4x1xf32, #tpu.memory_space<vmem>>, vector<4x1xf32>,
      %c0_56 = arith.constant 0 : index
      %c0_57 = arith.constant 0 : index
      %74 = vector.load %arg12[%c0_56, %c0_57] : memref<4x1xf32, #tpu.memory_space<vmem>>, vector<4x1xf32>
      tpu.vector_store %arg12[%c0_56, %c0_57], %68 {strides = array<i32>} : memref<4x1xf32, #tpu.memory_space<vmem>>, vector<4x1xf32>,
      %c0_58 = arith.constant 0 : index
      %c0_59 = arith.constant 0 : index
      %75 = vector.load %arg13[%c0_58, %c0_59] : memref<4x1xf32, #tpu.memory_space<vmem>>, vector<4x1xf32>
      tpu.vector_store %arg13[%c0_58, %c0_59], %68 {strides = array<i32>} : memref<4x1xf32, #tpu.memory_space<vmem>>, vector<4x1xf32>,
    } else {
    }
    %c0 = arith.constant 0 : index
    %c0_1 = arith.constant 0 : index
    %3 = vector.load %arg5[%c0, %c0_1] : memref<4x4096xf32, #tpu.memory_space<vmem>>, vector<4x4096xf32>
    %c0_2 = arith.constant 0 : index
    %c0_3 = arith.constant 0 : index
    %4 = vector.load %arg2[%c0_2, %c0_3] : memref<4x4096xf32, #tpu.memory_space<vmem>>, vector<4x4096xf32>
    %c0_4 = arith.constant 0 : index
    %c0_5 = arith.constant 0 : index
    %5 = vector.load %arg3[%c0_4, %c0_5] : memref<4x4096xf32, #tpu.memory_space<vmem>>, vector<4x4096xf32>
    %c0_6 = arith.constant 0 : index
    %c0_7 = arith.constant 0 : index
    %6 = vector.load %arg4[%c0_6, %c0_7] : memref<4x4096xf32, #tpu.memory_space<vmem>>, vector<4x4096xf32>
    %c1_i32 = arith.constant 1 : i32
    %7 = arith.muli %arg0, %c1_i32 : i32
    %8 = arith.addi %7, %arg1 : i32
    %9 = tpu.iota {dimensions = array<i32: 1>} : vector<4x4096xi32>
    %c4096_i32 = arith.constant 4096 : i32
    %10 = arith.muli %8, %c4096_i32 : i32
    %11 = vector.broadcast %10 : i32 to vector<4x4096xi32>
    %12 = arith.addi %11, %9 : vector<4x4096xi32>
    %c4000_i32 = arith.constant 4000 : i32
    %13 = vector.broadcast %c4000_i32 : i32 to vector<4x4096xi32>
    %14 = arith.cmpi slt, %12, %13 : vector<4x4096xi32>
    %cst = arith.constant 0.000000e+00 : f32
    %15 = vector.broadcast %cst : f32 to vector<4x4096xf32>
    %16 = arith.select %14, %3, %15 : vector<4x4096xi1>, vector<4x4096xf32>
    %17 = arith.select %14, %4, %15 : vector<4x4096xi1>, vector<4x4096xf32>
    %18 = arith.select %14, %5, %15 : vector<4x4096xi1>, vector<4x4096xf32>
    %19 = arith.select %14, %6, %15 : vector<4x4096xi1>, vector<4x4096xf32>
    %c0_8 = arith.constant 0 : index
    %c0_9 = arith.constant 0 : index
    %20 = vector.load %arg7[%c0_8, %c0_9] : memref<4x1xf32, #tpu.memory_space<vmem>>, vector<4x1xf32>
    %21 = arith.mulf %16, %16 : vector<4x4096xf32>
    %cst_10 = arith.constant dense<0.000000e+00> : vector<4xf32>
    %22 = vector.multi_reduction <add>, %21, %cst_10 [1] : vector<4x4096xf32> to vector<4xf32>
    %23 = vector.shape_cast %22 : vector<4xf32> to vector<4x1xf32>
    %24 = arith.addf %20, %23 : vector<4x1xf32>
    %c0_11 = arith.constant 0 : index
    %c0_12 = arith.constant 0 : index
    %25 = vector.load %arg7[%c0_11, %c0_12] : memref<4x1xf32, #tpu.memory_space<vmem>>, vector<4x1xf32>
    tpu.vector_store %arg7[%c0_11, %c0_12], %24 {strides = array<i32>} : memref<4x1xf32, #tpu.memory_space<vmem>>, vector<4x1xf32>,
    %c0_13 = arith.constant 0 : index
    %c0_14 = arith.constant 0 : index
    %26 = vector.load %arg8[%c0_13, %c0_14] : memref<4x1xf32, #tpu.memory_space<vmem>>, vector<4x1xf32>
    %27 = arith.mulf %17, %16 : vector<4x4096xf32>
    %cst_15 = arith.constant dense<0.000000e+00> : vector<4xf32>
    %28 = vector.multi_reduction <add>, %27, %cst_15 [1] : vector<4x4096xf32> to vector<4xf32>
    %29 = vector.shape_cast %28 : vector<4xf32> to vector<4x1xf32>
    %30 = arith.addf %26, %29 : vector<4x1xf32>
    %c0_16 = arith.constant 0 : index
    %c0_17 = arith.constant 0 : index
    %31 = vector.load %arg8[%c0_16, %c0_17] : memref<4x1xf32, #tpu.memory_space<vmem>>, vector<4x1xf32>
    tpu.vector_store %arg8[%c0_16, %c0_17], %30 {strides = array<i32>} : memref<4x1xf32, #tpu.memory_space<vmem>>, vector<4x1xf32>,
    %c0_18 = arith.constant 0 : index
    %c0_19 = arith.constant 0 : index
    %32 = vector.load %arg9[%c0_18, %c0_19] : memref<4x1xf32, #tpu.memory_space<vmem>>, vector<4x1xf32>
    %33 = arith.mulf %18, %16 : vector<4x4096xf32>
    %cst_20 = arith.constant dense<0.000000e+00> : vector<4xf32>
    %34 = vector.multi_reduction <add>, %33, %cst_20 [1] : vector<4x4096xf32> to vector<4xf32>
    %35 = vector.shape_cast %34 : vector<4xf32> to vector<4x1xf32>
    %36 = arith.addf %32, %35 : vector<4x1xf32>
    %c0_21 = arith.constant 0 : index
    %c0_22 = arith.constant 0 : index
    %37 = vector.load %arg9[%c0_21, %c0_22] : memref<4x1xf32, #tpu.memory_space<vmem>>, vector<4x1xf32>
    tpu.vector_store %arg9[%c0_21, %c0_22], %36 {strides = array<i32>} : memref<4x1xf32, #tpu.memory_space<vmem>>, vector<4x1xf32>,
    %c0_23 = arith.constant 0 : index
    %c0_24 = arith.constant 0 : index
    %38 = vector.load %arg10[%c0_23, %c0_24] : memref<4x1xf32, #tpu.memory_space<vmem>>, vector<4x1xf32>
    %39 = arith.mulf %19, %16 : vector<4x4096xf32>
    %cst_25 = arith.constant dense<0.000000e+00> : vector<4xf32>
    %40 = vector.multi_reduction <add>, %39, %cst_25 [1] : vector<4x4096xf32> to vector<4xf32>
    %41 = vector.shape_cast %40 : vector<4xf32> to vector<4x1xf32>
    %42 = arith.addf %38, %41 : vector<4x1xf32>
    %c0_26 = arith.constant 0 : index
    %c0_27 = arith.constant 0 : index
    %43 = vector.load %arg10[%c0_26, %c0_27] : memref<4x1xf32, #tpu.memory_space<vmem>>, vector<4x1xf32>
    tpu.vector_store %arg10[%c0_26, %c0_27], %42 {strides = array<i32>} : memref<4x1xf32, #tpu.memory_space<vmem>>, vector<4x1xf32>,
    %44 = arith.subf %17, %16 : vector<4x4096xf32>
    %45 = arith.subf %18, %16 : vector<4x4096xf32>
    %46 = arith.subf %19, %16 : vector<4x4096xf32>
    %c0_28 = arith.constant 0 : index
    %c0_29 = arith.constant 0 : index
    %47 = vector.load %arg11[%c0_28, %c0_29] : memref<4x1xf32, #tpu.memory_space<vmem>>, vector<4x1xf32>
    %48 = arith.mulf %44, %44 : vector<4x4096xf32>
    %cst_30 = arith.constant dense<0.000000e+00> : vector<4xf32>
    %49 = vector.multi_reduction <add>, %48, %cst_30 [1] : vector<4x4096xf32> to vector<4xf32>
    %50 = vector.shape_cast %49 : vector<4xf32> to vector<4x1xf32>
    %51 = arith.addf %47, %50 : vector<4x1xf32>
    %c0_31 = arith.constant 0 : index
    %c0_32 = arith.constant 0 : index
    %52 = vector.load %arg11[%c0_31, %c0_32] : memref<4x1xf32, #tpu.memory_space<vmem>>, vector<4x1xf32>
    tpu.vector_store %arg11[%c0_31, %c0_32], %51 {strides = array<i32>} : memref<4x1xf32, #tpu.memory_space<vmem>>, vector<4x1xf32>,
    %c0_33 = arith.constant 0 : index
    %c0_34 = arith.constant 0 : index
    %53 = vector.load %arg12[%c0_33, %c0_34] : memref<4x1xf32, #tpu.memory_space<vmem>>, vector<4x1xf32>
    %54 = arith.mulf %45, %45 : vector<4x4096xf32>
    %cst_35 = arith.constant dense<0.000000e+00> : vector<4xf32>
    %55 = vector.multi_reduction <add>, %54, %cst_35 [1] : vector<4x4096xf32> to vector<4xf32>
    %56 = vector.shape_cast %55 : vector<4xf32> to vector<4x1xf32>
    %57 = arith.addf %53, %56 : vector<4x1xf32>
    %c0_36 = arith.constant 0 : index
    %c0_37 = arith.constant 0 : index
    %58 = vector.load %arg12[%c0_36, %c0_37] : memref<4x1xf32, #tpu.memory_space<vmem>>, vector<4x1xf32>
    tpu.vector_store %arg12[%c0_36, %c0_37], %57 {strides = array<i32>} : memref<4x1xf32, #tpu.memory_space<vmem>>, vector<4x1xf32>,
    %c0_38 = arith.constant 0 : index
    %c0_39 = arith.constant 0 : index
    %59 = vector.load %arg13[%c0_38, %c0_39] : memref<4x1xf32, #tpu.memory_space<vmem>>, vector<4x1xf32>
    %60 = arith.mulf %46, %46 : vector<4x4096xf32>
    %cst_40 = arith.constant dense<0.000000e+00> : vector<4xf32>
    %61 = vector.multi_reduction <add>, %60, %cst_40 [1] : vector<4x4096xf32> to vector<4xf32>
    %62 = vector.shape_cast %61 : vector<4xf32> to vector<4x1xf32>
    %63 = arith.addf %59, %62 : vector<4x1xf32>
    %c0_41 = arith.constant 0 : index
    %c0_42 = arith.constant 0 : index
    %64 = vector.load %arg13[%c0_41, %c0_42] : memref<4x1xf32, #tpu.memory_space<vmem>>, vector<4x1xf32>
    tpu.vector_store %arg13[%c0_41, %c0_42], %63 {strides = array<i32>} : memref<4x1xf32, #tpu.memory_space<vmem>>, vector<4x1xf32>,
    %c0_i32_43 = arith.constant 0 : i32
    %65 = arith.cmpi eq, %arg1, %c0_i32_43 : i32
    %66 = arith.extui %65 : i1 to i32
    %c0_i32_44 = arith.constant 0 : i32
    %67 = arith.cmpi ne, %66, %c0_i32_44 : i32
    scf.if %67 {
      %c0_45 = arith.constant 0 : index
      %c0_46 = arith.constant 0 : index
      %68 = vector.load %arg7[%c0_45, %c0_46] : memref<4x1xf32, #tpu.memory_space<vmem>>, vector<4x1xf32>
      %c0_47 = arith.constant 0 : index
      %c0_48 = arith.constant 0 : index
      %c0_49 = arith.constant 0 : index
      %69 = vector.load %arg6[%c0_47, %c0_48, %c0_49] : memref<1x4x7xf32, #tpu.memory_space<vmem>>, vector<1x4x1xf32>
      %70 = vector.shape_cast %69 : vector<1x4x1xf32> to vector<4x1xf32>
      %71 = vector.shape_cast %68 : vector<4x1xf32> to vector<1x4x1xf32>
      tpu.vector_store %arg6[%c0_47, %c0_48, %c0_49], %71 {strides = array<i32>} : memref<1x4x7xf32, #tpu.memory_space<vmem>>, vector<1x4x1xf32>,
      %c0_50 = arith.constant 0 : index
      %c0_51 = arith.constant 0 : index
      %72 = vector.load %arg8[%c0_50, %c0_51] : memref<4x1xf32, #tpu.memory_space<vmem>>, vector<4x1xf32>
      %c0_52 = arith.constant 0 : index
      %c0_53 = arith.constant 0 : index
      %c1 = arith.constant 1 : index
      %73 = vector.load %arg6[%c0_52, %c0_53, %c1] : memref<1x4x7xf32, #tpu.memory_space<vmem>>, vector<1x4x1xf32>
      %74 = vector.shape_cast %73 : vector<1x4x1xf32> to vector<4x1xf32>
      %75 = vector.shape_cast %72 : vector<4x1xf32> to vector<1x4x1xf32>
      tpu.vector_store %arg6[%c0_52, %c0_53, %c1], %75 {strides = array<i32>} : memref<1x4x7xf32, #tpu.memory_space<vmem>>, vector<1x4x1xf32>,
      %c0_54 = arith.constant 0 : index
      %c0_55 = arith.constant 0 : index
      %76 = vector.load %arg9[%c0_54, %c0_55] : memref<4x1xf32, #tpu.memory_space<vmem>>, vector<4x1xf32>
      %c0_56 = arith.constant 0 : index
      %c0_57 = arith.constant 0 : index
      %c2 = arith.constant 2 : index
      %77 = vector.load %arg6[%c0_56, %c0_57, %c2] : memref<1x4x7xf32, #tpu.memory_space<vmem>>, vector<1x4x1xf32>
      %78 = vector.shape_cast %77 : vector<1x4x1xf32> to vector<4x1xf32>
      %79 = vector.shape_cast %76 : vector<4x1xf32> to vector<1x4x1xf32>
      tpu.vector_store %arg6[%c0_56, %c0_57, %c2], %79 {strides = array<i32>} : memref<1x4x7xf32, #tpu.memory_space<vmem>>, vector<1x4x1xf32>,
      %c0_58 = arith.constant 0 : index
      %c0_59 = arith.constant 0 : index
      %80 = vector.load %arg10[%c0_58, %c0_59] : memref<4x1xf32, #tpu.memory_space<vmem>>, vector<4x1xf32>
      %c0_60 = arith.constant 0 : index
      %c0_61 = arith.constant 0 : index
      %c3 = arith.constant 3 : index
      %81 = vector.load %arg6[%c0_60, %c0_61, %c3] : memref<1x4x7xf32, #tpu.memory_space<vmem>>, vector<1x4x1xf32>
      %82 = vector.shape_cast %81 : vector<1x4x1xf32> to vector<4x1xf32>
      %83 = vector.shape_cast %80 : vector<4x1xf32> to vector<1x4x1xf32>
      tpu.vector_store %arg6[%c0_60, %c0_61, %c3], %83 {strides = array<i32>} : memref<1x4x7xf32, #tpu.memory_space<vmem>>, vector<1x4x1xf32>,
      %c0_62 = arith.constant 0 : index
      %c0_63 = arith.constant 0 : index
      %84 = vector.load %arg11[%c0_62, %c0_63] : memref<4x1xf32, #tpu.memory_space<vmem>>, vector<4x1xf32>
      %c0_64 = arith.constant 0 : index
      %c0_65 = arith.constant 0 : index
      %c4 = arith.constant 4 : index
      %85 = vector.load %arg6[%c0_64, %c0_65, %c4] : memref<1x4x7xf32, #tpu.memory_space<vmem>>, vector<1x4x1xf32>
      %86 = vector.shape_cast %85 : vector<1x4x1xf32> to vector<4x1xf32>
      %87 = vector.shape_cast %84 : vector<4x1xf32> to vector<1x4x1xf32>
      tpu.vector_store %arg6[%c0_64, %c0_65, %c4], %87 {strides = array<i32>} : memref<1x4x7xf32, #tpu.memory_space<vmem>>, vector<1x4x1xf32>,
      %c0_66 = arith.constant 0 : index
      %c0_67 = arith.constant 0 : index
      %88 = vector.load %arg12[%c0_66, %c0_67] : memref<4x1xf32, #tpu.memory_space<vmem>>, vector<4x1xf32>
      %c0_68 = arith.constant 0 : index
      %c0_69 = arith.constant 0 : index
      %c5 = arith.constant 5 : index
      %89 = vector.load %arg6[%c0_68, %c0_69, %c5] : memref<1x4x7xf32, #tpu.memory_space<vmem>>, vector<1x4x1xf32>
      %90 = vector.shape_cast %89 : vector<1x4x1xf32> to vector<4x1xf32>
      %91 = vector.shape_cast %88 : vector<4x1xf32> to vector<1x4x1xf32>
      tpu.vector_store %arg6[%c0_68, %c0_69, %c5], %91 {strides = array<i32>} : memref<1x4x7xf32, #tpu.memory_space<vmem>>, vector<1x4x1xf32>,
      %c0_70 = arith.constant 0 : index
      %c0_71 = arith.constant 0 : index
      %92 = vector.load %arg13[%c0_70, %c0_71] : memref<4x1xf32, #tpu.memory_space<vmem>>, vector<4x1xf32>
      %c0_72 = arith.constant 0 : index
      %c0_73 = arith.constant 0 : index
      %c6 = arith.constant 6 : index
      %93 = vector.load %arg6[%c0_72, %c0_73, %c6] : memref<1x4x7xf32, #tpu.memory_space<vmem>>, vector<1x4x1xf32>
      %94 = vector.shape_cast %93 : vector<1x4x1xf32> to vector<4x1xf32>
      %95 = vector.shape_cast %92 : vector<4x1xf32> to vector<1x4x1xf32>
      tpu.vector_store %arg6[%c0_72, %c0_73, %c6], %95 {strides = array<i32>} : memref<1x4x7xf32, #tpu.memory_space<vmem>>, vector<1x4x1xf32>,
    } else {
    }
    return
  }
  func.func @transform_0(%arg0: i32, %arg1: i32) -> (i32, i32) {
    %c1_i32 = arith.constant 1 : i32
    %0 = arith.muli %arg0, %c1_i32 : i32
    %1 = arith.addi %0, %arg1 : i32
    %c0_i32 = arith.constant 0 : i32
    %2 = arith.minsi %1, %c0_i32 : i32
    %c0_i32_0 = arith.constant 0 : i32
    %c0_i32_1 = arith.constant 0 : i32
    return %c0_i32_0, %2 : i32, i32
  }
  func.func @transform_1(%arg0: i32, %arg1: i32) -> (i32, i32) {
    %c1_i32 = arith.constant 1 : i32
    %0 = arith.muli %arg0, %c1_i32 : i32
    %1 = arith.addi %0, %arg1 : i32
    %c0_i32 = arith.constant 0 : i32
    %2 = arith.minsi %1, %c0_i32 : i32
    %c0_i32_0 = arith.constant 0 : i32
    %c0_i32_1 = arith.constant 0 : i32
    return %c0_i32_0, %2 : i32, i32
  }
  func.func @transform_2(%arg0: i32, %arg1: i32) -> (i32, i32) {
    %c1_i32 = arith.constant 1 : i32
    %0 = arith.muli %arg0, %c1_i32 : i32
    %1 = arith.addi %0, %arg1 : i32
    %c0_i32 = arith.constant 0 : i32
    %2 = arith.minsi %1, %c0_i32 : i32
    %c0_i32_0 = arith.constant 0 : i32
    %c0_i32_1 = arith.constant 0 : i32
    return %c0_i32_0, %2 : i32, i32
  }
  func.func @transform_3(%arg0: i32, %arg1: i32) -> (i32, i32) {
    %c1_i32 = arith.constant 1 : i32
    %0 = arith.muli %arg0, %c1_i32 : i32
    %1 = arith.addi %0, %arg1 : i32
    %c0_i32 = arith.constant 0 : i32
    %2 = arith.minsi %1, %c0_i32 : i32
    %c0_i32_0 = arith.constant 0 : i32
    %c0_i32_1 = arith.constant 0 : i32
    return %c0_i32_0, %2 : i32, i32
  }
  func.func @transform_4(%arg0: i32, %arg1: i32) -> (i32, i32, i32) {
    %c0_i32 = arith.constant 0 : i32
    %c0_i32_0 = arith.constant 0 : i32
    %c0_i32_1 = arith.constant 0 : i32
    return %arg0, %c0_i32, %c0_i32_0 : i32, i32, i32
  }
}

</mosaic_0001>

<llo_original>
// kernel: spex_plus_loss.1
$region0: #{spex_plus_loss.1}
  #allocation0 [shape = 'u32[]', space=smem, size = 0x4, offset = 0x4, fixed_abs, tag = 'smem constant byte address 0x4 - core index']
  #allocation1 [shape = 'u32[72,128]{1,0:T(1,128)}', space=vmem, size = 0x9000, scoped, tag = 'internal scratch']
  #allocation2 [shape = 'f32[4,1]{1,0:T(4,128)}', space=vmem, size = 0x800, scoped, tag = 'scratch operand']
  #allocation3 [shape = 'f32[4,1]{1,0:T(4,128)}', space=vmem, size = 0x800, scoped, tag = 'scratch operand']
  #allocation4 [shape = 'f32[4,1]{1,0:T(4,128)}', space=vmem, size = 0x800, scoped, tag = 'scratch operand']
  #allocation5 [shape = 'f32[4,1]{1,0:T(4,128)}', space=vmem, size = 0x800, scoped, tag = 'scratch operand']
  #allocation6 [shape = 'f32[4,1]{1,0:T(4,128)}', space=vmem, size = 0x800, scoped, tag = 'scratch operand']
  #allocation7 [shape = 'f32[4,1]{1,0:T(4,128)}', space=vmem, size = 0x800, scoped, tag = 'scratch operand']
  #allocation8 [shape = 'f32[4,1]{1,0:T(4,128)}', space=vmem, size = 0x800, scoped, tag = 'scratch operand']
  %s0 = inlined_call_operand.hbm [shape: f32[4,4000], index: 0, kind: input, shape index: {}]
  %s1 = inlined_call_operand.hbm [shape: f32[4,4000], index: 1, kind: input, shape index: {}]
  %s2 = inlined_call_operand.hbm [shape: f32[4,4000], index: 2, kind: input, shape index: {}]
  %s3 = inlined_call_operand.hbm [shape: f32[4,4000], index: 3, kind: input, shape index: {}]
  %s4 = inlined_call_operand.vmem [shape: f32[1,4,7], index: 4, kind: output, shape index: {}]
  %s5 = sld [smem:[#allocation0]]
  $region50: #{spex_plus_loss.1} parent=0
    _
  %s7 = ssub.s32 1, %s5
  %s8 = scalar_select 0, %s7, %s5
  $region1: #{spex_plus_loss.1} parent=0
    #allocation9 [shape = 'u8[65536]{0}', space=vmem, size = 0x10000, scoped, tag = 'input window, operand 0, single buffered']
    #allocation10 [shape = 's32[1]{0}', space=sflag, size = 0x4, scoped, tag = 'scoped memory for spex_plus_loss.1']
    #allocation11 [shape = 'u8[65536]{0}', space=vmem, size = 0x10000, scoped, tag = 'input window, operand 1, single buffered']
    #allocation12 [shape = 's32[1]{0}', space=sflag, size = 0x4, scoped, tag = 'scoped memory for spex_plus_loss.1']
    #allocation13 [shape = 'u8[65536]{0}', space=vmem, size = 0x10000, scoped, tag = 'input window, operand 2, single buffered']
    #allocation14 [shape = 'u8[65536]{0}', space=vmem, size = 0x10000, scoped, tag = 'input window, operand 3, single buffered']
    #allocation15 [shape = 's32[1]{0}', space=sflag, size = 0x4, scoped, tag = 'scoped memory for spex_plus_loss.1']
    %9 = vsyncpa [#allocation10], 0
    %10 = vsyncpa [#allocation12], 0
    %11 = vsyncpa [#allocation15], 0
    // Predicated region
    $region2: #{spex_plus_loss.1} parent=1 // pred_check
      _
    $region3: #{spex_plus_loss.1} parent=1 // pred_check_branch
      %13 = sbr.rel (0) target = $region5
    $region4: #{spex_plus_loss.1} parent=1 // pred_region
      %s14 = sadd.s32 0, 0
      %p15 = scmp.lt.s32.totalorder %s14, 0
      %s16 = scalar_select %p15, %s14, 0
      %s17 = smul.u32 32, %s16
      %19 = vsyncadd [#allocation10], 0
      %s20 = smul.addr %s17, 4
      %s21 = scalar_lea.hbm %s0, %s20
      %s23 = sshll.u32 %s21, 4
      %s24 = int_to_ptr.hbm [resolvable:$true] %s23
      %s25 = sshll.u32 [#allocation9], 4
      %s26 = int_to_ptr.vmem [resolvable:$true] %s25
      %28 = dma.hbm_to_vmem [thread:$0]  %s24, 2048, %s26, [#allocation10]
    $region5: #{spex_plus_loss.1} parent=1 // pred_fallthru
      _
    // Predicated region
    $region6: #{spex_plus_loss.1} parent=1 // pred_check
      _
    $region7: #{spex_plus_loss.1} parent=1 // pred_check_branch
      %30 = sbr.rel (0) target = $region9
    $region8: #{spex_plus_loss.1} parent=1 // pred_region
      %s31 = sadd.s32 0, 0
      %p32 = scmp.lt.s32.totalorder %s31, 0
      %s33 = scalar_select %p32, %s31, 0
      %s34 = smul.u32 32, %s33
      %36 = vsyncadd [#allocation12], 0
      %s37 = smul.addr %s34, 4
      %s38 = scalar_lea.hbm %s1, %s37
      %s40 = sshll.u32 %s38, 4
      %s41 = int_to_ptr.hbm [resolvable:$true] %s40
      %s42 = sshll.u32 [#allocation11], 4
      %s43 = int_to_ptr.vmem [resolvable:$true] %s42
      %45 = dma.hbm_to_vmem [thread:$0]  %s41, 2048, %s43, [#allocation12]
    $region9: #{spex_plus_loss.1} parent=1 // pred_fallthru
      _
    // Predicated region
    $region10: #{spex_plus_loss.1} parent=1 // pred_check
      _
    $region11: #{spex_plus_loss.1} parent=1 // pred_check_branch
      %47 = sbr.rel (0) target = $region13
    $region12: #{spex_plus_loss.1} parent=1 // pred_region
      %s48 = sadd.s32 0, 0
      %p49 = scmp.lt.s32.totalorder %s48, 0
      %s50 = scalar_select %p49, %s48, 0
      %s51 = smul.u32 32, %s50
      %53 = vsyncadd [#allocation12], 0
      %s54 = smul.addr %s51, 4
      %s55 = scalar_lea.hbm %s2, %s54
      %s57 = sshll.u32 %s55, 4
      %s58 = int_to_ptr.hbm [resolvable:$true] %s57
      %s59 = sshll.u32 [#allocation13], 4
      %s60 = int_to_ptr.vmem [resolvable:$true] %s59
      %62 = dma.hbm_to_vmem [thread:$0]  %s58, 2048, %s60, [#allocation12]
    $region13: #{spex_plus_loss.1} parent=1 // pred_fallthru
      _
    // Predicated region
    $region14: #{spex_plus_loss.1} parent=1 // pred_check
      _
    $region15: #{spex_plus_loss.1} parent=1 // pred_check_branch
      %64 = sbr.rel (0) target = $region17
    $region16: #{spex_plus_loss.1} parent=1 // pred_region
      %s65 = sadd.s32 0, 0
      %p66 = scmp.lt.s32.totalorder %s65, 0
      %s67 = scalar_select %p66, %s65, 0
      %s68 = smul.u32 32, %s67
      %70 = vsyncadd [#allocation15], 0
      %s71 = smul.addr %s68, 4
      %s72 = scalar_lea.hbm %s3, %s71
      %s74 = sshll.u32 %s72, 4
      %s75 = int_to_ptr.hbm [resolvable:$true] %s74
      %s76 = sshll.u32 [#allocation14], 4
      %s77 = int_to_ptr.vmem [resolvable:$true] %s76
      %79 = dma.hbm_to_vmem [thread:$0]  %s75, 2048, %s77, [#allocation15]
    $region17: #{spex_plus_loss.1} parent=1 // pred_fallthru
      _
    // Predicated region
    $region18: #{spex_plus_loss.1} parent=1 // pred_check
      _
    $region19: #{spex_plus_loss.1} parent=1 // pred_check_branch
      %81 = sbr.rel (0) target = $region21
    $region20: #{spex_plus_loss.1} parent=1 // pred_region
      %83 = dma.done [#allocation10], 2048
    $region21: #{spex_plus_loss.1} parent=1 // pred_fallthru
      _
    // Predicated region
    $region22: #{spex_plus_loss.1} parent=1 // pred_check
      _
    $region23: #{spex_plus_loss.1} parent=1 // pred_check_branch
      %85 = sbr.rel (0) target = $region25
    $region24: #{spex_plus_loss.1} parent=1 // pred_region
      %87 = dma.done [#allocation12], 2048
    $region25: #{spex_plus_loss.1} parent=1 // pred_fallthru
      _
    // Predicated region
    $region26: #{spex_plus_loss.1} parent=1 // pred_check
      _
    $region27: #{spex_plus_loss.1} parent=1 // pred_check_branch
      %89 = sbr.rel (0) target = $region29
    $region28: #{spex_plus_loss.1} parent=1 // pred_region
      %91 = dma.done [#allocation12], 2048
    $region29: #{spex_plus_loss.1} parent=1 // pred_fallthru
      _
    // Predicated region
    $region30: #{spex_plus_loss.1} parent=1 // pred_check
      _
    $region31: #{spex_plus_loss.1} parent=1 // pred_check_branch
      %93 = sbr.rel (0) target = $region33
    $region32: #{spex_plus_loss.1} parent=1 // pred_region
      %95 = dma.done [#allocation15], 2048
    $region33: #{spex_plus_loss.1} parent=1 // pred_fallthru
      _
    %s96 = sadd.s32 0, 0
    %p97 = scmp.lt.s32.totalorder %s96, 0
    %s98 = scalar_select %p97, %s96, 0
    %s99 = smul.u32 32, %s98
    %s100 = sadd.s32 0, 0
    %p101 = scmp.lt.s32.totalorder %s100, 0
    %s102 = scalar_select %p101, %s100, 0
    %s103 = smul.u32 32, %s102
    %s104 = sadd.s32 0, 0
    %p105 = scmp.lt.s32.totalorder %s104, 0
    %s106 = scalar_select %p105, %s104, 0
    %s107 = smul.u32 32, %s106
    %s108 = sadd.s32 0, 0
    %p109 = scmp.lt.s32.totalorder %s108, 0
    %s110 = scalar_select %p109, %s108, 0
    %s111 = smul.u32 32, %s110
    %p112 = scmp.eq.s32.totalorder 0, 0
    // Predicated region
    $region34: #{spex_plus_loss.1} parent=1 // pred_check
      %p113 = pneg %p112
    $region35: #{spex_plus_loss.1} parent=1 // pred_check_branch
      %115 = sbr.rel (%p113) target = $region37
    $region36: #{spex_plus_loss.1} parent=1 // pred_region
      %vm116 = vcmask 3072
      %117 = vst.msk [vmem:[#allocation2] sm:$0xf] %vm116, 0.0
      %118 = vst.msk [vmem:[#allocation3] sm:$0xf] %vm116, 0.0
      %119 = vst.msk [vmem:[#allocation4] sm:$0xf] %vm116, 0.0
      %120 = vst.msk [vmem:[#allocation5] sm:$0xf] %vm116, 0.0
      %121 = vst.msk [vmem:[#allocation6] sm:$0xf] %vm116, 0.0
      %122 = vst.msk [vmem:[#allocation7] sm:$0xf] %vm116, 0.0
      %123 = vst.msk [vmem:[#allocation8] sm:$0xf] %vm116, 0.0
    $region37: #{spex_plus_loss.1} parent=1 // pred_fallthru
      _
    %v124 = vld [vmem:[#allocation14] sm:$0xff]
    %v125 = vld [vmem:[#allocation14 + $0x8] sm:$0xff]
    %v126 = vld [vmem:[#allocation14 + $0x10] sm:$0xff]
    %v127 = vld [vmem:[#allocation14 + $0x18] sm:$0xff]
    %v128 = vld [vmem:[#allocation14 + $0x20] sm:$0xff]
    %v129 = vld [vmem:[#allocation14 + $0x28] sm:$0xff]
    %v130 = vld [vmem:[#allocation14 + $0x30] sm:$0xff]
    %v131 = vld [vmem:[#allocation14 + $0x38] sm:$0xff]
    %v132 = vld [vmem:[#allocation14 + $0x40] sm:$0xff]
    %v133 = vld [vmem:[#allocation14 + $0x48] sm:$0xff]
    %v134 = vld [vmem:[#allocation14 + $0x50] sm:$0xff]
    %v135 = vld [vmem:[#allocation14 + $0x58] sm:$0xff]
    %v136 = vld [vmem:[#allocation14 + $0x60] sm:$0xff]
    %v137 = vld [vmem:[#allocation14 + $0x68] sm:$0xff]
    %v138 = vld [vmem:[#allocation14 + $0x70] sm:$0xff]
    %v139 = vld [vmem:[#allocation14 + $0x78] sm:$0xff]
    %v140 = vld [vmem:[#allocation9] sm:$0xff]
    %v141 = vld [vmem:[#allocation9 + $0x8] sm:$0xff]
    %v142 = vld [vmem:[#allocation9 + $0x10] sm:$0xff]
    %v143 = vld [vmem:[#allocation9 + $0x18] sm:$0xff]
    %v144 = vld [vmem:[#allocation9 + $0x20] sm:$0xff]
    %v145 = vld [vmem:[#allocation9 + $0x28] sm:$0xff]
    %v146 = vld [vmem:[#allocation9 + $0x30] sm:$0xff]
    %v147 = vld [vmem:[#allocation9 + $0x38] sm:$0xff]
    %v148 = vld [vmem:[#allocation9 + $0x40] sm:$0xff]
    %v149 = vld [vmem:[#allocation9 + $0x48] sm:$0xff]
    %v150 = vld [vmem:[#allocation9 + $0x50] sm:$0xff]
    %v151 = vld [vmem:[#allocation9 + $0x58] sm:$0xff]
    %v152 = vld [vmem:[#allocation9 + $0x60] sm:$0xff]
    %v153 = vld [vmem:[#allocation9 + $0x68] sm:$0xff]
    %v154 = vld [vmem:[#allocation9 + $0x70] sm:$0xff]
    %v155 = vld [vmem:[#allocation9 + $0x78] sm:$0xff]
    %v156 = vld [vmem:[#allocation11] sm:$0xff]
    %v157 = vld [vmem:[#allocation11 + $0x8] sm:$0xff]
    %v158 = vld [vmem:[#allocation11 + $0x10] sm:$0xff]
    %v159 = vld [vmem:[#allocation11 + $0x18] sm:$0xff]
    %v160 = vld [vmem:[#allocation11 + $0x20] sm:$0xff]
    %v161 = vld [vmem:[#allocation11 + $0x28] sm:$0xff]
    %v162 = vld [vmem:[#allocation11 + $0x30] sm:$0xff]
    %v163 = vld [vmem:[#allocation11 + $0x38] sm:$0xff]
    %v164 = vld [vmem:[#allocation11 + $0x40] sm:$0xff]
    %v165 = vld [vmem:[#allocation11 + $0x48] sm:$0xff]
    %v166 = vld [vmem:[#allocation11 + $0x50] sm:$0xff]
    %v167 = vld [vmem:[#allocation11 + $0x58] sm:$0xff]
    %v168 = vld [vmem:[#allocation11 + $0x60] sm:$0xff]
    %v169 = vld [vmem:[#allocation11 + $0x68] sm:$0xff]
    %v170 = vld [vmem:[#allocation11 + $0x70] sm:$0xff]
    %v171 = vld [vmem:[#allocation11 + $0x78] sm:$0xff]
    %v172 = vld [vmem:[#allocation13] sm:$0xff]
    %v173 = vld [vmem:[#allocation13 + $0x8] sm:$0xff]
    %v174 = vld [vmem:[#allocation13 + $0x10] sm:$0xff]
    %v175 = vld [vmem:[#allocation13 + $0x18] sm:$0xff]
    %v176 = vld [vmem:[#allocation13 + $0x20] sm:$0xff]
    %v177 = vld [vmem:[#allocation13 + $0x28] sm:$0xff]
    %v178 = vld [vmem:[#allocation13 + $0x30] sm:$0xff]
    %v179 = vld [vmem:[#allocation13 + $0x38] sm:$0xff]
    %v180 = vld [vmem:[#allocation13 + $0x40] sm:$0xff]
    %v181 = vld [vmem:[#allocation13 + $0x48] sm:$0xff]
    %v182 = vld [vmem:[#allocation13 + $0x50] sm:$0xff]
    %v183 = vld [vmem:[#allocation13 + $0x58] sm:$0xff]
    %v184 = vld [vmem:[#allocation13 + $0x60] sm:$0xff]
    %v185 = vld [vmem:[#allocation13 + $0x68] sm:$0xff]
    %v186 = vld [vmem:[#allocation13 + $0x70] sm:$0xff]
    %v187 = vld [vmem:[#allocation13 + $0x78] sm:$0xff]
    %s188 = sadd.s32 0, 0
    %v189 = vlaneseq
    %v190 = vand.u32 %v189, 127
    %v191 = vadd.s32 %v190, 128
    %v192 = vadd.s32 %v190, 256
    %v193 = vadd.s32 %v190, 384
    %v194 = vadd.s32 %v190, 512
    %v195 = vadd.s32 %v190, 640
    %v196 = vadd.s32 %v190, 768
    %v197 = vadd.s32 %v190, 896
    %v198 = vadd.s32 %v190, 1024
    %v199 = vadd.s32 %v190, 1152
    %v200 = vadd.s32 %v190, 1280
    %v201 = vadd.s32 %v190, 1408
    %v202 = vadd.s32 %v190, 1536
    %v203 = vadd.s32 %v190, 1664
    %v204 = vadd.s32 %v190, 1792
    %v205 = vadd.s32 %v190, 1920
    %v206 = vadd.s32 %v190, 2048
    %v207 = vadd.s32 %v190, 2176
    %v208 = vadd.s32 %v190, 2304
    %v209 = vadd.s32 %v190, 2432
    %v210 = vadd.s32 %v190, 2560
    %v211 = vadd.s32 %v190, 2688
    %v212 = vadd.s32 %v190, 2816
    %v213 = vadd.s32 %v190, 2944
    %v214 = vadd.s32 %v190, 3072
    %v215 = vadd.s32 %v190, 3200
    %v216 = vadd.s32 %v190, 3328
    %v217 = vadd.s32 %v190, 3456
    %v218 = vadd.s32 %v190, 3584
    %v219 = vadd.s32 %v190, 3712
    %v220 = vadd.s32 %v190, 3840
    %v221 = vadd.s32 %v190, 3968
    %s222 = smul.u32 %s188, 4096
    %v223 = vstv %s222
    %v224 = vadd.s32 %v223, %v190
    %v225 = vadd.s32 %v223, %v191
    %v226 = vadd.s32 %v223, %v192
    %v227 = vadd.s32 %v223, %v193
    %v228 = vadd.s32 %v223, %v194
    %v229 = vadd.s32 %v223, %v195
    %v230 = vadd.s32 %v223, %v196
    %v231 = vadd.s32 %v223, %v197
    %v232 = vadd.s32 %v223, %v198
    %v233 = vadd.s32 %v223, %v199
    %v234 = vadd.s32 %v223, %v200
    %v235 = vadd.s32 %v223, %v201
    %v236 = vadd.s32 %v223, %v202
    %v237 = vadd.s32 %v223, %v203
    %v238 = vadd.s32 %v223, %v204
    %v239 = vadd.s32 %v223, %v205
    %v240 = vadd.s32 %v223, %v206
    %v241 = vadd.s32 %v223, %v207
    %v242 = vadd.s32 %v223, %v208
    %v243 = vadd.s32 %v223, %v209
    %v244 = vadd.s32 %v223, %v210
    %v245 = vadd.s32 %v223, %v211
    %v246 = vadd.s32 %v223, %v212
    %v247 = vadd.s32 %v223, %v213
    %v248 = vadd.s32 %v223, %v214
    %v249 = vadd.s32 %v223, %v215
    %v250 = vadd.s32 %v223, %v216
    %v251 = vadd.s32 %v223, %v217
    %v252 = vadd.s32 %v223, %v218
    %v253 = vadd.s32 %v223, %v219
    %v254 = vadd.s32 %v223, %v220
    %v255 = vadd.s32 %v223, %v221
    %vm256 = vcmp.lt.s32.totalorder %v224, 4000
    %vm257 = vcmp.lt.s32.totalorder %v225, 4000
    %vm258 = vcmp.lt.s32.totalorder %v226, 4000
    %vm259 = vcmp.lt.s32.totalorder %v227, 4000
    %vm260 = vcmp.lt.s32.totalorder %v228, 4000
    %vm261 = vcmp.lt.s32.totalorder %v229, 4000
    %vm262 = vcmp.lt.s32.totalorder %v230, 4000
    %vm263 = vcmp.lt.s32.totalorder %v231, 4000
    %vm264 = vcmp.lt.s32.totalorder %v232, 4000
    %vm265 = vcmp.lt.s32.totalorder %v233, 4000
    %vm266 = vcmp.lt.s32.totalorder %v234, 4000
    %vm267 = vcmp.lt.s32.totalorder %v235, 4000
    %vm268 = vcmp.lt.s32.totalorder %v236, 4000
    %vm269 = vcmp.lt.s32.totalorder %v237, 4000
    %vm270 = vcmp.lt.s32.totalorder %v238, 4000
    %vm271 = vcmp.lt.s32.totalorder %v239, 4000
    %vm272 = vcmp.lt.s32.totalorder %v240, 4000
    %vm273 = vcmp.lt.s32.totalorder %v241, 4000
    %vm274 = vcmp.lt.s32.totalorder %v242, 4000
    %vm275 = vcmp.lt.s32.totalorder %v243, 4000
    %vm276 = vcmp.lt.s32.totalorder %v244, 4000
    %vm277 = vcmp.lt.s32.totalorder %v245, 4000
    %vm278 = vcmp.lt.s32.totalorder %v246, 4000
    %vm279 = vcmp.lt.s32.totalorder %v247, 4000
    %vm280 = vcmp.lt.s32.totalorder %v248, 4000
    %vm281 = vcmp.lt.s32.totalorder %v249, 4000
    %vm282 = vcmp.lt.s32.totalorder %v250, 4000
    %vm283 = vcmp.lt.s32.totalorder %v251, 4000
    %vm284 = vcmp.lt.s32.totalorder %v252, 4000
    %vm285 = vcmp.lt.s32.totalorder %v253, 4000
    %vm286 = vcmp.lt.s32.totalorder %v254, 4000
    %vm287 = vcmp.lt.s32.totalorder %v255, 4000
    %304 = vst [vmem:[#allocation1] ss:$2 sm:$0xff] %v124
    %s305 = scalar_lea.vmem [#allocation1], 16
    %306 = vst [vmem:[%s305] ss:$2 sm:$0xff] %v125
    %s307 = scalar_lea.vmem [#allocation1], 32
    %308 = vst [vmem:[%s307] ss:$2 sm:$0xff] %v126
    %s309 = scalar_lea.vmem [#allocation1], 48
    %310 = vst [vmem:[%s309] ss:$2 sm:$0xff] %v127
    %v311 = vld.sshfl [vmem:[#allocation1] sm:$0xff pattern:$0x75316420]
    %v312 = vld.sshfl [vmem:[#allocation1 + $0x8] sm:$0xff pattern:$0x75316420]
    %v313 = vld.sshfl [vmem:[#allocation1 + $0x10] sm:$0xff pattern:$0x75316420]
    %v314 = vld.sshfl [vmem:[#allocation1 + $0x18] sm:$0xff pattern:$0x75316420]
    %v315 = vld.sshfl [vmem:[#allocation1 + $0x20] sm:$0xff pattern:$0x75316420]
    %v316 = vld.sshfl [vmem:[#allocation1 + $0x28] sm:$0xff pattern:$0x75316420]
    %v317 = vld.sshfl [vmem:[#allocation1 + $0x30] sm:$0xff pattern:$0x75316420]
    %v318 = vld.sshfl [vmem:[#allocation1 + $0x38] sm:$0xff pattern:$0x75316420]
    %319 = vst [vmem:[#allocation1] ss:$2 sm:$0xff] %v128
    %320 = vst [vmem:[%s305] ss:$2 sm:$0xff] %v129
    %321 = vst [vmem:[%s307] ss:$2 sm:$0xff] %v130
    %322 = vst [vmem:[%s309] ss:$2 sm:$0xff] %v131
    %v323 = vld.sshfl [vmem:[#allocation1] sm:$0xff pattern:$0x75316420]
    %v324 = vld.sshfl [vmem:[#allocation1 + $0x8] sm:$0xff pattern:$0x75316420]
    %v325 = vld.sshfl [vmem:[#allocation1 + $0x10] sm:$0xff pattern:$0x75316420]
    %v326 = vld.sshfl [vmem:[#allocation1 + $0x18] sm:$0xff pattern:$0x75316420]
    %v327 = vld.sshfl [vmem:[#allocation1 + $0x20] sm:$0xff pattern:$0x75316420]
    %v328 = vld.sshfl [vmem:[#allocation1 + $0x28] sm:$0xff pattern:$0x75316420]
    %v329 = vld.sshfl [vmem:[#allocation1 + $0x30] sm:$0xff pattern:$0x75316420]
    %v330 = vld.sshfl [vmem:[#allocation1 + $0x38] sm:$0xff pattern:$0x75316420]
    %331 = vst [vmem:[#allocation1] ss:$2 sm:$0xff] %v132
    %332 = vst [vmem:[%s305] ss:$2 sm:$0xff] %v133
    %333 = vst [vmem:[%s307] ss:$2 sm:$0xff] %v134
    %334 = vst [vmem:[%s309] ss:$2 sm:$0xff] %v135
    %v335 = vld.sshfl [vmem:[#allocation1] sm:$0xff pattern:$0x75316420]
    %v336 = vld.sshfl [vmem:[#allocation1 + $0x8] sm:$0xff pattern:$0x75316420]
    %v337 = vld.sshfl [vmem:[#allocation1 + $0x10] sm:$0xff pattern:$0x75316420]
    %v338 = vld.sshfl [vmem:[#allocation1 + $0x18] sm:$0xff pattern:$0x75316420]
    %v339 = vld.sshfl [vmem:[#allocation1 + $0x20] sm:$0xff pattern:$0x75316420]
    %v340 = vld.sshfl [vmem:[#allocation1 + $0x28] sm:$0xff pattern:$0x75316420]
    %v341 = vld.sshfl [vmem:[#allocation1 + $0x30] sm:$0xff pattern:$0x75316420]
    %v342 = vld.sshfl [vmem:[#allocation1 + $0x38] sm:$0xff pattern:$0x75316420]
    %343 = vst [vmem:[#allocation1] ss:$2 sm:$0xff] %v136
    %344 = vst [vmem:[%s305] ss:$2 sm:$0xff] %v137
    %345 = vst [vmem:[%s307] ss:$2 sm:$0xff] %v138
    %346 = vst [vmem:[%s309] ss:$2 sm:$0xff] %v139
    %v347 = vld.sshfl [vmem:[#allocation1] sm:$0xff pattern:$0x75316420]
    %v348 = vld.sshfl [vmem:[#allocation1 + $0x8] sm:$0xff pattern:$0x75316420]
    %v349 = vld.sshfl [vmem:[#allocation1 + $0x10] sm:$0xff pattern:$0x75316420]
    %v350 = vld.sshfl [vmem:[#allocation1 + $0x18] sm:$0xff pattern:$0x75316420]
    %v351 = vld.sshfl [vmem:[#allocation1 + $0x20] sm:$0xff pattern:$0x75316420]
    %v352 = vld.sshfl [vmem:[#allocation1 + $0x28] sm:$0xff pattern:$0x75316420]
    %v353 = vld.sshfl [vmem:[#allocation1 + $0x30] sm:$0xff pattern:$0x75316420]
    %v354 = vld.sshfl [vmem:[#allocation1 + $0x38] sm:$0xff pattern:$0x75316420]
    %v387 = vsel %vm256, %v311, 0.0
    %v388 = vsel %vm257, %v312, 0.0
    %v389 = vsel %vm258, %v313, 0.0
    %v390 = vsel %vm259, %v314, 0.0
    %v391 = vsel %vm260, %v315, 0.0
    %v392 = vsel %vm261, %v316, 0.0
    %v393 = vsel %vm262, %v317, 0.0
    %v394 = vsel %vm263, %v318, 0.0
    %v395 = vsel %vm264, %v323, 0.0
    %v396 = vsel %vm265, %v324, 0.0
    %v397 = vsel %vm266, %v325, 0.0
    %v398 = vsel %vm267, %v326, 0.0
    %v399 = vsel %vm268, %v327, 0.0
    %v400 = vsel %vm269, %v328, 0.0
    %v401 = vsel %vm270, %v329, 0.0
    %v402 = vsel %vm271, %v330, 0.0
    %v403 = vsel %vm272, %v335, 0.0
    %v404 = vsel %vm273, %v336, 0.0
    %v405 = vsel %vm274, %v337, 0.0
    %v406 = vsel %vm275, %v338, 0.0
    %v407 = vsel %vm276, %v339, 0.0
    %v408 = vsel %vm277, %v340, 0.0
    %v409 = vsel %vm278, %v341, 0.0
    %v410 = vsel %vm279, %v342, 0.0
    %v411 = vsel %vm280, %v347, 0.0
    %v412 = vsel %vm281, %v348, 0.0
    %v413 = vsel %vm282, %v349, 0.0
    %v414 = vsel %vm283, %v350, 0.0
    %v415 = vsel %vm284, %v351, 0.0
    %v416 = vsel %vm285, %v352, 0.0
    %v417 = vsel %vm286, %v353, 0.0
    %v418 = vsel %vm287, %v354, 0.0
    %435 = vst [vmem:[#allocation1] ss:$2 sm:$0xff] %v140
    %s436 = scalar_lea.vmem [#allocation1], 16
    %437 = vst [vmem:[%s436] ss:$2 sm:$0xff] %v141
    %s438 = scalar_lea.vmem [#allocation1], 32
    %439 = vst [vmem:[%s438] ss:$2 sm:$0xff] %v142
    %s440 = scalar_lea.vmem [#allocation1], 48
    %441 = vst [vmem:[%s440] ss:$2 sm:$0xff] %v143
    %v442 = vld.sshfl [vmem:[#allocation1] sm:$0xff pattern:$0x75316420]
    %v443 = vld.sshfl [vmem:[#allocation1 + $0x8] sm:$0xff pattern:$0x75316420]
    %v444 = vld.sshfl [vmem:[#allocation1 + $0x10] sm:$0xff pattern:$0x75316420]
    %v445 = vld.sshfl [vmem:[#allocation1 + $0x18] sm:$0xff pattern:$0x75316420]
    %v446 = vld.sshfl [vmem:[#allocation1 + $0x20] sm:$0xff pattern:$0x75316420]
    %v447 = vld.sshfl [vmem:[#allocation1 + $0x28] sm:$0xff pattern:$0x75316420]
    %v448 = vld.sshfl [vmem:[#allocation1 + $0x30] sm:$0xff pattern:$0x75316420]
    %v449 = vld.sshfl [vmem:[#allocation1 + $0x38] sm:$0xff pattern:$0x75316420]
    %450 = vst [vmem:[#allocation1] ss:$2 sm:$0xff] %v144
    %451 = vst [vmem:[%s436] ss:$2 sm:$0xff] %v145
    %452 = vst [vmem:[%s438] ss:$2 sm:$0xff] %v146
    %453 = vst [vmem:[%s440] ss:$2 sm:$0xff] %v147
    %v454 = vld.sshfl [vmem:[#allocation1] sm:$0xff pattern:$0x75316420]
    %v455 = vld.sshfl [vmem:[#allocation1 + $0x8] sm:$0xff pattern:$0x75316420]
    %v456 = vld.sshfl [vmem:[#allocation1 + $0x10] sm:$0xff pattern:$0x75316420]
    %v457 = vld.sshfl [vmem:[#allocation1 + $0x18] sm:$0xff pattern:$0x75316420]
    %v458 = vld.sshfl [vmem:[#allocation1 + $0x20] sm:$0xff pattern:$0x75316420]
    %v459 = vld.sshfl [vmem:[#allocation1 + $0x28] sm:$0xff pattern:$0x75316420]
    %v460 = vld.sshfl [vmem:[#allocation1 + $0x30] sm:$0xff pattern:$0x75316420]
    %v461 = vld.sshfl [vmem:[#allocation1 + $0x38] sm:$0xff pattern:$0x75316420]
    %462 = vst [vmem:[#allocation1] ss:$2 sm:$0xff] %v148
    %463 = vst [vmem:[%s436] ss:$2 sm:$0xff] %v149
    %464 = vst [vmem:[%s438] ss:$2 sm:$0xff] %v150
    %465 = vst [vmem:[%s440] ss:$2 sm:$0xff] %v151
    %v466 = vld.sshfl [vmem:[#allocation1] sm:$0xff pattern:$0x75316420]
    %v467 = vld.sshfl [vmem:[#allocation1 + $0x8] sm:$0xff pattern:$0x75316420]
    %v468 = vld.sshfl [vmem:[#allocation1 + $0x10] sm:$0xff pattern:$0x75316420]
    %v469 = vld.sshfl [vmem:[#allocation1 + $0x18] sm:$0xff pattern:$0x75316420]
    %v470 = vld.sshfl [vmem:[#allocation1 + $0x20] sm:$0xff pattern:$0x75316420]
    %v471 = vld.sshfl [vmem:[#allocation1 + $0x28] sm:$0xff pattern:$0x75316420]
    %v472 = vld.sshfl [vmem:[#allocation1 + $0x30] sm:$0xff pattern:$0x75316420]
    %v473 = vld.sshfl [vmem:[#allocation1 + $0x38] sm:$0xff pattern:$0x75316420]
    %474 = vst [vmem:[#allocation1] ss:$2 sm:$0xff] %v152
    %475 = vst [vmem:[%s436] ss:$2 sm:$0xff] %v153
    %476 = vst [vmem:[%s438] ss:$2 sm:$0xff] %v154
    %477 = vst [vmem:[%s440] ss:$2 sm:$0xff] %v155
    %v478 = vld.sshfl [vmem:[#allocation1] sm:$0xff pattern:$0x75316420]
    %v479 = vld.sshfl [vmem:[#allocation1 + $0x8] sm:$0xff pattern:$0x75316420]
    %v480 = vld.sshfl [vmem:[#allocation1 + $0x10] sm:$0xff pattern:$0x75316420]
    %v481 = vld.sshfl [vmem:[#allocation1 + $0x18] sm:$0xff pattern:$0x75316420]
    %v482 = vld.sshfl [vmem:[#allocation1 + $0x20] sm:$0xff pattern:$0x75316420]
    %v483 = vld.sshfl [vmem:[#allocation1 + $0x28] sm:$0xff pattern:$0x75316420]
    %v484 = vld.sshfl [vmem:[#allocation1 + $0x30] sm:$0xff pattern:$0x75316420]
    %v485 = vld.sshfl [vmem:[#allocation1 + $0x38] sm:$0xff pattern:$0x75316420]
    %v518 = vsel %vm256, %v442, 0.0
    %v519 = vsel %vm257, %v443, 0.0
    %v520 = vsel %vm258, %v444, 0.0
    %v521 = vsel %vm259, %v445, 0.0
    %v522 = vsel %vm260, %v446, 0.0
    %v523 = vsel %vm261, %v447, 0.0
    %v524 = vsel %vm262, %v448, 0.0
    %v525 = vsel %vm263, %v449, 0.0
    %v526 = vsel %vm264, %v454, 0.0
    %v527 = vsel %vm265, %v455, 0.0
    %v528 = vsel %vm266, %v456, 0.0
    %v529 = vsel %vm267, %v457, 0.0
    %v530 = vsel %vm268, %v458, 0.0
    %v531 = vsel %vm269, %v459, 0.0
    %v532 = vsel %vm270, %v460, 0.0
    %v533 = vsel %vm271, %v461, 0.0
    %v534 = vsel %vm272, %v466, 0.0
    %v535 = vsel %vm273, %v467, 0.0
    %v536 = vsel %vm274, %v468, 0.0
    %v537 = vsel %vm275, %v469, 0.0
    %v538 = vsel %vm276, %v470, 0.0
    %v539 = vsel %vm277, %v471, 0.0
    %v540 = vsel %vm278, %v472, 0.0
    %v541 = vsel %vm279, %v473, 0.0
    %v542 = vsel %vm280, %v478, 0.0
    %v543 = vsel %vm281, %v479, 0.0
    %v544 = vsel %vm282, %v480, 0.0
    %v545 = vsel %vm283, %v481, 0.0
    %v546 = vsel %vm284, %v482, 0.0
    %v547 = vsel %vm285, %v483, 0.0
    %v548 = vsel %vm286, %v484, 0.0
    %v549 = vsel %vm287, %v485, 0.0
    %566 = vst [vmem:[#allocation1] ss:$2 sm:$0xff] %v156
    %s567 = scalar_lea.vmem [#allocation1], 16
    %568 = vst [vmem:[%s567] ss:$2 sm:$0xff] %v157
    %s569 = scalar_lea.vmem [#allocation1], 32
    %570 = vst [vmem:[%s569] ss:$2 sm:$0xff] %v158
    %s571 = scalar_lea.vmem [#allocation1], 48
    %572 = vst [vmem:[%s571] ss:$2 sm:$0xff] %v159
    %v573 = vld.sshfl [vmem:[#allocation1] sm:$0xff pattern:$0x75316420]
    %v574 = vld.sshfl [vmem:[#allocation1 + $0x8] sm:$0xff pattern:$0x75316420]
    %v575 = vld.sshfl [vmem:[#allocation1 + $0x10] sm:$0xff pattern:$0x75316420]
    %v576 = vld.sshfl [vmem:[#allocation1 + $0x18] sm:$0xff pattern:$0x75316420]
    %v577 = vld.sshfl [vmem:[#allocation1 + $0x20] sm:$0xff pattern:$0x75316420]
    %v578 = vld.sshfl [vmem:[#allocation1 + $0x28] sm:$0xff pattern:$0x75316420]
    %v579 = vld.sshfl [vmem:[#allocation1 + $0x30] sm:$0xff pattern:$0x75316420]
    %v580 = vld.sshfl [vmem:[#allocation1 + $0x38] sm:$0xff pattern:$0x75316420]
    %581 = vst [vmem:[#allocation1] ss:$2 sm:$0xff] %v160
    %582 = vst [vmem:[%s567] ss:$2 sm:$0xff] %v161
    %583 = vst [vmem:[%s569] ss:$2 sm:$0xff] %v162
    %584 = vst [vmem:[%s571] ss:$2 sm:$0xff] %v163
    %v585 = vld.sshfl [vmem:[#allocation1] sm:$0xff pattern:$0x75316420]
    %v586 = vld.sshfl [vmem:[#allocation1 + $0x8] sm:$0xff pattern:$0x75316420]
    %v587 = vld.sshfl [vmem:[#allocation1 + $0x10] sm:$0xff pattern:$0x75316420]
    %v588 = vld.sshfl [vmem:[#allocation1 + $0x18] sm:$0xff pattern:$0x75316420]
    %v589 = vld.sshfl [vmem:[#allocation1 + $0x20] sm:$0xff pattern:$0x75316420]
    %v590 = vld.sshfl [vmem:[#allocation1 + $0x28] sm:$0xff pattern:$0x75316420]
    %v591 = vld.sshfl [vmem:[#allocation1 + $0x30] sm:$0xff pattern:$0x75316420]
    %v592 = vld.sshfl [vmem:[#allocation1 + $0x38] sm:$0xff pattern:$0x75316420]
    %593 = vst [vmem:[#allocation1] ss:$2 sm:$0xff] %v164
    %594 = vst [vmem:[%s567] ss:$2 sm:$0xff] %v165
    %595 = vst [vmem:[%s569] ss:$2 sm:$0xff] %v166
    %596 = vst [vmem:[%s571] ss:$2 sm:$0xff] %v167
    %v597 = vld.sshfl [vmem:[#allocation1] sm:$0xff pattern:$0x75316420]
    %v598 = vld.sshfl [vmem:[#allocation1 + $0x8] sm:$0xff pattern:$0x75316420]
    %v599 = vld.sshfl [vmem:[#allocation1 + $0x10] sm:$0xff pattern:$0x75316420]
    %v600 = vld.sshfl [vmem:[#allocation1 + $0x18] sm:$0xff pattern:$0x75316420]
    %v601 = vld.sshfl [vmem:[#allocation1 + $0x20] sm:$0xff pattern:$0x75316420]
    %v602 = vld.sshfl [vmem:[#allocation1 + $0x28] sm:$0xff pattern:$0x75316420]
    %v603 = vld.sshfl [vmem:[#allocation1 + $0x30] sm:$0xff pattern:$0x75316420]
    %v604 = vld.sshfl [vmem:[#allocation1 + $0x38] sm:$0xff pattern:$0x75316420]
    %605 = vst [vmem:[#allocation1] ss:$2 sm:$0xff] %v168
    %606 = vst [vmem:[%s567] ss:$2 sm:$0xff] %v169
    %607 = vst [vmem:[%s569] ss:$2 sm:$0xff] %v170
    %608 = vst [vmem:[%s571] ss:$2 sm:$0xff] %v171
    %v609 = vld.sshfl [vmem:[#allocation1] sm:$0xff pattern:$0x75316420]
    %v610 = vld.sshfl [vmem:[#allocation1 + $0x8] sm:$0xff pattern:$0x75316420]
    %v611 = vld.sshfl [vmem:[#allocation1 + $0x10] sm:$0xff pattern:$0x75316420]
    %v612 = vld.sshfl [vmem:[#allocation1 + $0x18] sm:$0xff pattern:$0x75316420]
    %v613 = vld.sshfl [vmem:[#allocation1 + $0x20] sm:$0xff pattern:$0x75316420]
    %v614 = vld.sshfl [vmem:[#allocation1 + $0x28] sm:$0xff pattern:$0x75316420]
    %v615 = vld.sshfl [vmem:[#allocation1 + $0x30] sm:$0xff pattern:$0x75316420]
    %v616 = vld.sshfl [vmem:[#allocation1 + $0x38] sm:$0xff pattern:$0x75316420]
    %v649 = vsel %vm256, %v573, 0.0
    %v650 = vsel %vm257, %v574, 0.0
    %v651 = vsel %vm258, %v575, 0.0
    %v652 = vsel %vm259, %v576, 0.0
    %v653 = vsel %vm260, %v577, 0.0
    %v654 = vsel %vm261, %v578, 0.0
    %v655 = vsel %vm262, %v579, 0.0
    %v656 = vsel %vm263, %v580, 0.0
    %v657 = vsel %vm264, %v585, 0.0
    %v658 = vsel %vm265, %v586, 0.0
    %v659 = vsel %vm266, %v587, 0.0
    %v660 = vsel %vm267, %v588, 0.0
    %v661 = vsel %vm268, %v589, 0.0
    %v662 = vsel %vm269, %v590, 0.0
    %v663 = vsel %vm270, %v591, 0.0
    %v664 = vsel %vm271, %v592, 0.0
    %v665 = vsel %vm272, %v597, 0.0
    %v666 = vsel %vm273, %v598, 0.0
    %v667 = vsel %vm274, %v599, 0.0
    %v668 = vsel %vm275, %v600, 0.0
    %v669 = vsel %vm276, %v601, 0.0
    %v670 = vsel %vm277, %v602, 0.0
    %v671 = vsel %vm278, %v603, 0.0
    %v672 = vsel %vm279, %v604, 0.0
    %v673 = vsel %vm280, %v609, 0.0
    %v674 = vsel %vm281, %v610, 0.0
    %v675 = vsel %vm282, %v611, 0.0
    %v676 = vsel %vm283, %v612, 0.0
    %v677 = vsel %vm284, %v613, 0.0
    %v678 = vsel %vm285, %v614, 0.0
    %v679 = vsel %vm286, %v615, 0.0
    %v680 = vsel %vm287, %v616, 0.0
    %697 = vst [vmem:[#allocation1] ss:$2 sm:$0xff] %v172
    %s698 = scalar_lea.vmem [#allocation1], 16
    %699 = vst [vmem:[%s698] ss:$2 sm:$0xff] %v173
    %s700 = scalar_lea.vmem [#allocation1], 32
    %701 = vst [vmem:[%s700] ss:$2 sm:$0xff] %v174
    %s702 = scalar_lea.vmem [#allocation1], 48
    %703 = vst [vmem:[%s702] ss:$2 sm:$0xff] %v175
    %v704 = vld.sshfl [vmem:[#allocation1] sm:$0xff pattern:$0x75316420]
    %v705 = vld.sshfl [vmem:[#allocation1 + $0x8] sm:$0xff pattern:$0x75316420]
    %v706 = vld.sshfl [vmem:[#allocation1 + $0x10] sm:$0xff pattern:$0x75316420]
    %v707 = vld.sshfl [vmem:[#allocation1 + $0x18] sm:$0xff pattern:$0x75316420]
    %v708 = vld.sshfl [vmem:[#allocation1 + $0x20] sm:$0xff pattern:$0x75316420]
    %v709 = vld.sshfl [vmem:[#allocation1 + $0x28] sm:$0xff pattern:$0x75316420]
    %v710 = vld.sshfl [vmem:[#allocation1 + $0x30] sm:$0xff pattern:$0x75316420]
    %v711 = vld.sshfl [vmem:[#allocation1 + $0x38] sm:$0xff pattern:$0x75316420]
    %712 = vst [vmem:[#allocation1] ss:$2 sm:$0xff] %v176
    %713 = vst [vmem:[%s698] ss:$2 sm:$0xff] %v177
    %714 = vst [vmem:[%s700] ss:$2 sm:$0xff] %v178
    %715 = vst [vmem:[%s702] ss:$2 sm:$0xff] %v179
    %v716 = vld.sshfl [vmem:[#allocation1] sm:$0xff pattern:$0x75316420]
    %v717 = vld.sshfl [vmem:[#allocation1 + $0x8] sm:$0xff pattern:$0x75316420]
    %v718 = vld.sshfl [vmem:[#allocation1 + $0x10] sm:$0xff pattern:$0x75316420]
    %v719 = vld.sshfl [vmem:[#allocation1 + $0x18] sm:$0xff pattern:$0x75316420]
    %v720 = vld.sshfl [vmem:[#allocation1 + $0x20] sm:$0xff pattern:$0x75316420]
    %v721 = vld.sshfl [vmem:[#allocation1 + $0x28] sm:$0xff pattern:$0x75316420]
    %v722 = vld.sshfl [vmem:[#allocation1 + $0x30] sm:$0xff pattern:$0x75316420]
    %v723 = vld.sshfl [vmem:[#allocation1 + $0x38] sm:$0xff pattern:$0x75316420]
    %724 = vst [vmem:[#allocation1] ss:$2 sm:$0xff] %v180
    %725 = vst [vmem:[%s698] ss:$2 sm:$0xff] %v181
    %726 = vst [vmem:[%s700] ss:$2 sm:$0xff] %v182
    %727 = vst [vmem:[%s702] ss:$2 sm:$0xff] %v183
    %v728 = vld.sshfl [vmem:[#allocation1] sm:$0xff pattern:$0x75316420]
    %v729 = vld.sshfl [vmem:[#allocation1 + $0x8] sm:$0xff pattern:$0x75316420]
    %v730 = vld.sshfl [vmem:[#allocation1 + $0x10] sm:$0xff pattern:$0x75316420]
    %v731 = vld.sshfl [vmem:[#allocation1 + $0x18] sm:$0xff pattern:$0x75316420]
    %v732 = vld.sshfl [vmem:[#allocation1 + $0x20] sm:$0xff pattern:$0x75316420]
    %v733 = vld.sshfl [vmem:[#allocation1 + $0x28] sm:$0xff pattern:$0x75316420]
    %v734 = vld.sshfl [vmem:[#allocation1 + $0x30] sm:$0xff pattern:$0x75316420]
    %v735 = vld.sshfl [vmem:[#allocation1 + $0x38] sm:$0xff pattern:$0x75316420]
    %736 = vst [vmem:[#allocation1] ss:$2 sm:$0xff] %v184
    %737 = vst [vmem:[%s698] ss:$2 sm:$0xff] %v185
    %738 = vst [vmem:[%s700] ss:$2 sm:$0xff] %v186
    %739 = vst [vmem:[%s702] ss:$2 sm:$0xff] %v187
    %v740 = vld.sshfl [vmem:[#allocation1] sm:$0xff pattern:$0x75316420]
    %v741 = vld.sshfl [vmem:[#allocation1 + $0x8] sm:$0xff pattern:$0x75316420]
    %v742 = vld.sshfl [vmem:[#allocation1 + $0x10] sm:$0xff pattern:$0x75316420]
    %v743 = vld.sshfl [vmem:[#allocation1 + $0x18] sm:$0xff pattern:$0x75316420]
    %v744 = vld.sshfl [vmem:[#allocation1 + $0x20] sm:$0xff pattern:$0x75316420]
    %v745 = vld.sshfl [vmem:[#allocation1 + $0x28] sm:$0xff pattern:$0x75316420]
    %v746 = vld.sshfl [vmem:[#allocation1 + $0x30] sm:$0xff pattern:$0x75316420]
    %v747 = vld.sshfl [vmem:[#allocation1 + $0x38] sm:$0xff pattern:$0x75316420]
    %v780 = vsel %vm256, %v704, 0.0
    %v781 = vsel %vm257, %v705, 0.0
    %v782 = vsel %vm258, %v706, 0.0
    %v783 = vsel %vm259, %v707, 0.0
    %v784 = vsel %vm260, %v708, 0.0
    %v785 = vsel %vm261, %v709, 0.0
    %v786 = vsel %vm262, %v710, 0.0
    %v787 = vsel %vm263, %v711, 0.0
    %v788 = vsel %vm264, %v716, 0.0
    %v789 = vsel %vm265, %v717, 0.0
    %v790 = vsel %vm266, %v718, 0.0
    %v791 = vsel %vm267, %v719, 0.0
    %v792 = vsel %vm268, %v720, 0.0
    %v793 = vsel %vm269, %v721, 0.0
    %v794 = vsel %vm270, %v722, 0.0
    %v795 = vsel %vm271, %v723, 0.0
    %v796 = vsel %vm272, %v728, 0.0
    %v797 = vsel %vm273, %v729, 0.0
    %v798 = vsel %vm274, %v730, 0.0
    %v799 = vsel %vm275, %v731, 0.0
    %v800 = vsel %vm276, %v732, 0.0
    %v801 = vsel %vm277, %v733, 0.0
    %v802 = vsel %vm278, %v734, 0.0
    %v803 = vsel %vm279, %v735, 0.0
    %v804 = vsel %vm280, %v740, 0.0
    %v805 = vsel %vm281, %v741, 0.0
    %v806 = vsel %vm282, %v742, 0.0
    %v807 = vsel %vm283, %v743, 0.0
    %v808 = vsel %vm284, %v744, 0.0
    %v809 = vsel %vm285, %v745, 0.0
    %v810 = vsel %vm286, %v746, 0.0
    %v811 = vsel %vm287, %v747, 0.0
    %v812 = vld [vmem:[#allocation2] sm:$0xf]
    %v813 = vmul.f32 %v387, %v387
    %v814 = vmul.f32 %v388, %v388
    %v815 = vmul.f32 %v389, %v389
    %v816 = vmul.f32 %v390, %v390
    %v817 = vmul.f32 %v391, %v391
    %v818 = vmul.f32 %v392, %v392
    %v819 = vmul.f32 %v393, %v393
    %v820 = vmul.f32 %v394, %v394
    %v821 = vmul.f32 %v395, %v395
    %v822 = vmul.f32 %v396, %v396
    %v823 = vmul.f32 %v397, %v397
    %v824 = vmul.f32 %v398, %v398
    %v825 = vmul.f32 %v399, %v399
    %v826 = vmul.f32 %v400, %v400
    %v827 = vmul.f32 %v401, %v401
    %v828 = vmul.f32 %v402, %v402
    %v829 = vmul.f32 %v403, %v403
    %v830 = vmul.f32 %v404, %v404
    %v831 = vmul.f32 %v405, %v405
    %v832 = vmul.f32 %v406, %v406
    %v833 = vmul.f32 %v407, %v407
    %v834 = vmul.f32 %v408, %v408
    %v835 = vmul.f32 %v409, %v409
    %v836 = vmul.f32 %v410, %v410
    %v837 = vmul.f32 %v411, %v411
    %v838 = vmul.f32 %v412, %v412
    %v839 = vmul.f32 %v413, %v413
    %v840 = vmul.f32 %v414, %v414
    %v841 = vmul.f32 %v415, %v415
    %v842 = vmul.f32 %v416, %v416
    %v843 = vmul.f32 %v417, %v417
    %v844 = vmul.f32 %v418, %v418
    %vm845 = vcmask 1043456
    %v846 = vsel %vm845, %v813, 0.0
    %v847 = vsel %vm845, %v814, 0.0
    %v848 = vadd.f32 %v846, %v847
    %v849 = vsel %vm845, %v815, 0.0
    %v850 = vadd.f32 %v848, %v849
    %v851 = vsel %vm845, %v816, 0.0
    %v852 = vadd.f32 %v850, %v851
    %v853 = vsel %vm845, %v817, 0.0
    %v854 = vadd.f32 %v852, %v853
    %v855 = vsel %vm845, %v818, 0.0
    %v856 = vadd.f32 %v854, %v855
    %v857 = vsel %vm845, %v819, 0.0
    %v858 = vadd.f32 %v856, %v857
    %v859 = vsel %vm845, %v820, 0.0
    %v860 = vadd.f32 %v858, %v859
    %v861 = vsel %vm845, %v821, 0.0
    %v862 = vadd.f32 %v860, %v861
    %v863 = vsel %vm845, %v822, 0.0
    %v864 = vadd.f32 %v862, %v863
    %v865 = vsel %vm845, %v823, 0.0
    %v866 = vadd.f32 %v864, %v865
    %v867 = vsel %vm845, %v824, 0.0
    %v868 = vadd.f32 %v866, %v867
    %v869 = vsel %vm845, %v825, 0.0
    %v870 = vadd.f32 %v868, %v869
    %v871 = vsel %vm845, %v826, 0.0
    %v872 = vadd.f32 %v870, %v871
    %v873 = vsel %vm845, %v827, 0.0
    %v874 = vadd.f32 %v872, %v873
    %v875 = vsel %vm845, %v828, 0.0
    %v876 = vadd.f32 %v874, %v875
    %v877 = vsel %vm845, %v829, 0.0
    %v878 = vadd.f32 %v876, %v877
    %v879 = vsel %vm845, %v830, 0.0
    %v880 = vadd.f32 %v878, %v879
    %v881 = vsel %vm845, %v831, 0.0
    %v882 = vadd.f32 %v880, %v881
    %v883 = vsel %vm845, %v832, 0.0
    %v884 = vadd.f32 %v882, %v883
    %v885 = vsel %vm845, %v833, 0.0
    %v886 = vadd.f32 %v884, %v885
    %v887 = vsel %vm845, %v834, 0.0
    %v888 = vadd.f32 %v886, %v887
    %v889 = vsel %vm845, %v835, 0.0
    %v890 = vadd.f32 %v888, %v889
    %v891 = vsel %vm845, %v836, 0.0
    %v892 = vadd.f32 %v890, %v891
    %v893 = vsel %vm845, %v837, 0.0
    %v894 = vadd.f32 %v892, %v893
    %v895 = vsel %vm845, %v838, 0.0
    %v896 = vadd.f32 %v894, %v895
    %v897 = vsel %vm845, %v839, 0.0
    %v898 = vadd.f32 %v896, %v897
    %v899 = vsel %vm845, %v840, 0.0
    %v900 = vadd.f32 %v898, %v899
    %v901 = vsel %vm845, %v841, 0.0
    %v902 = vadd.f32 %v900, %v901
    %v903 = vsel %vm845, %v842, 0.0
    %v904 = vadd.f32 %v902, %v903
    %v905 = vsel %vm845, %v843, 0.0
    %v906 = vadd.f32 %v904, %v905
    %v907 = vsel %vm845, %v844, 0.0
    %v908 = vadd.f32 %v906, %v907
    %909 = vadd.xlane.f32.xlu0 %v908
    %v910 = vpop.xlane.xlu0 %909
    %v911 = vadd.f32 %v812, %v910
    %vm912 = vcmask 3072
    %913 = vst.msk [vmem:[#allocation2] sm:$0xf] %vm912, %v911
    %v914 = vld [vmem:[#allocation3] sm:$0xf]
    %v915 = vmul.f32 %v518, %v387
    %v916 = vmul.f32 %v519, %v388
    %v917 = vmul.f32 %v520, %v389
    %v918 = vmul.f32 %v521, %v390
    %v919 = vmul.f32 %v522, %v391
    %v920 = vmul.f32 %v523, %v392
    %v921 = vmul.f32 %v524, %v393
    %v922 = vmul.f32 %v525, %v394
    %v923 = vmul.f32 %v526, %v395
    %v924 = vmul.f32 %v527, %v396
    %v925 = vmul.f32 %v528, %v397
    %v926 = vmul.f32 %v529, %v398
    %v927 = vmul.f32 %v530, %v399
    %v928 = vmul.f32 %v531, %v400
    %v929 = vmul.f32 %v532, %v401
    %v930 = vmul.f32 %v533, %v402
    %v931 = vmul.f32 %v534, %v403
    %v932 = vmul.f32 %v535, %v404
    %v933 = vmul.f32 %v536, %v405
    %v934 = vmul.f32 %v537, %v406
    %v935 = vmul.f32 %v538, %v407
    %v936 = vmul.f32 %v539, %v408
    %v937 = vmul.f32 %v540, %v409
    %v938 = vmul.f32 %v541, %v410
    %v939 = vmul.f32 %v542, %v411
    %v940 = vmul.f32 %v543, %v412
    %v941 = vmul.f32 %v544, %v413
    %v942 = vmul.f32 %v545, %v414
    %v943 = vmul.f32 %v546, %v415
    %v944 = vmul.f32 %v547, %v416
    %v945 = vmul.f32 %v548, %v417
    %v946 = vmul.f32 %v549, %v418
    %v947 = vsel %vm845, %v915, 0.0
    %v948 = vsel %vm845, %v916, 0.0
    %v949 = vadd.f32 %v947, %v948
    %v950 = vsel %vm845, %v917, 0.0
    %v951 = vadd.f32 %v949, %v950
    %v952 = vsel %vm845, %v918, 0.0
    %v953 = vadd.f32 %v951, %v952
    %v954 = vsel %vm845, %v919, 0.0
    %v955 = vadd.f32 %v953, %v954
    %v956 = vsel %vm845, %v920, 0.0
    %v957 = vadd.f32 %v955, %v956
    %v958 = vsel %vm845, %v921, 0.0
    %v959 = vadd.f32 %v957, %v958
    %v960 = vsel %vm845, %v922, 0.0
    %v961 = vadd.f32 %v959, %v960
    %v962 = vsel %vm845, %v923, 0.0
    %v963 = vadd.f32 %v961, %v962
    %v964 = vsel %vm845, %v924, 0.0
    %v965 = vadd.f32 %v963, %v964
    %v966 = vsel %vm845, %v925, 0.0
    %v967 = vadd.f32 %v965, %v966
    %v968 = vsel %vm845, %v926, 0.0
    %v969 = vadd.f32 %v967, %v968
    %v970 = vsel %vm845, %v927, 0.0
    %v971 = vadd.f32 %v969, %v970
    %v972 = vsel %vm845, %v928, 0.0
    %v973 = vadd.f32 %v971, %v972
    %v974 = vsel %vm845, %v929, 0.0
    %v975 = vadd.f32 %v973, %v974
    %v976 = vsel %vm845, %v930, 0.0
    %v977 = vadd.f32 %v975, %v976
    %v978 = vsel %vm845, %v931, 0.0
    %v979 = vadd.f32 %v977, %v978
    %v980 = vsel %vm845, %v932, 0.0
    %v981 = vadd.f32 %v979, %v980
    %v982 = vsel %vm845, %v933, 0.0
    %v983 = vadd.f32 %v981, %v982
    %v984 = vsel %vm845, %v934, 0.0
    %v985 = vadd.f32 %v983, %v984
    %v986 = vsel %vm845, %v935, 0.0
    %v987 = vadd.f32 %v985, %v986
    %v988 = vsel %vm845, %v936, 0.0
    %v989 = vadd.f32 %v987, %v988
    %v990 = vsel %vm845, %v937, 0.0
    %v991 = vadd.f32 %v989, %v990
    %v992 = vsel %vm845, %v938, 0.0
    %v993 = vadd.f32 %v991, %v992
    %v994 = vsel %vm845, %v939, 0.0
    %v995 = vadd.f32 %v993, %v994
    %v996 = vsel %vm845, %v940, 0.0
    %v997 = vadd.f32 %v995, %v996
    %v998 = vsel %vm845, %v941, 0.0
    %v999 = vadd.f32 %v997, %v998
    %v1000 = vsel %vm845, %v942, 0.0
    %v1001 = vadd.f32 %v999, %v1000
    %v1002 = vsel %vm845, %v943, 0.0
    %v1003 = vadd.f32 %v1001, %v1002
    %v1004 = vsel %vm845, %v944, 0.0
    %v1005 = vadd.f32 %v1003, %v1004
    %v1006 = vsel %vm845, %v945, 0.0
    %v1007 = vadd.f32 %v1005, %v1006
    %v1008 = vsel %vm845, %v946, 0.0
    %v1009 = vadd.f32 %v1007, %v1008
    %1010 = vadd.xlane.f32.xlu0 %v1009
    %v1011 = vpop.xlane.xlu0 %1010
    %v1012 = vadd.f32 %v914, %v1011
    %1013 = vst.msk [vmem:[#allocation3] sm:$0xf] %vm912, %v1012
    %v1014 = vld [vmem:[#allocation4] sm:$0xf]
    %v1015 = vmul.f32 %v649, %v387
    %v1016 = vmul.f32 %v650, %v388
    %v1017 = vmul.f32 %v651, %v389
    %v1018 = vmul.f32 %v652, %v390
    %v1019 = vmul.f32 %v653, %v391
    %v1020 = vmul.f32 %v654, %v392
    %v1021 = vmul.f32 %v655, %v393
    %v1022 = vmul.f32 %v656, %v394
    %v1023 = vmul.f32 %v657, %v395
    %v1024 = vmul.f32 %v658, %v396
    %v1025 = vmul.f32 %v659, %v397
    %v1026 = vmul.f32 %v660, %v398
    %v1027 = vmul.f32 %v661, %v399
    %v1028 = vmul.f32 %v662, %v400
    %v1029 = vmul.f32 %v663, %v401
    %v1030 = vmul.f32 %v664, %v402
    %v1031 = vmul.f32 %v665, %v403
    %v1032 = vmul.f32 %v666, %v404
    %v1033 = vmul.f32 %v667, %v405
    %v1034 = vmul.f32 %v668, %v406
    %v1035 = vmul.f32 %v669, %v407
    %v1036 = vmul.f32 %v670, %v408
    %v1037 = vmul.f32 %v671, %v409
    %v1038 = vmul.f32 %v672, %v410
    %v1039 = vmul.f32 %v673, %v411
    %v1040 = vmul.f32 %v674, %v412
    %v1041 = vmul.f32 %v675, %v413
    %v1042 = vmul.f32 %v676, %v414
    %v1043 = vmul.f32 %v677, %v415
    %v1044 = vmul.f32 %v678, %v416
    %v1045 = vmul.f32 %v679, %v417
    %v1046 = vmul.f32 %v680, %v418
    %v1047 = vsel %vm845, %v1015, 0.0
    %v1048 = vsel %vm845, %v1016, 0.0
    %v1049 = vadd.f32 %v1047, %v1048
    %v1050 = vsel %vm845, %v1017, 0.0
    %v1051 = vadd.f32 %v1049, %v1050
    %v1052 = vsel %vm845, %v1018, 0.0
    %v1053 = vadd.f32 %v1051, %v1052
    %v1054 = vsel %vm845, %v1019, 0.0
    %v1055 = vadd.f32 %v1053, %v1054
    %v1056 = vsel %vm845, %v1020, 0.0
    %v1057 = vadd.f32 %v1055, %v1056
    %v1058 = vsel %vm845, %v1021, 0.0
    %v1059 = vadd.f32 %v1057, %v1058
    %v1060 = vsel %vm845, %v1022, 0.0
    %v1061 = vadd.f32 %v1059, %v1060
    %v1062 = vsel %vm845, %v1023, 0.0
    %v1063 = vadd.f32 %v1061, %v1062
    %v1064 = vsel %vm845, %v1024, 0.0
    %v1065 = vadd.f32 %v1063, %v1064
    %v1066 = vsel %vm845, %v1025, 0.0
    %v1067 = vadd.f32 %v1065, %v1066
    %v1068 = vsel %vm845, %v1026, 0.0
    %v1069 = vadd.f32 %v1067, %v1068
    %v1070 = vsel %vm845, %v1027, 0.0
    %v1071 = vadd.f32 %v1069, %v1070
    %v1072 = vsel %vm845, %v1028, 0.0
    %v1073 = vadd.f32 %v1071, %v1072
    %v1074 = vsel %vm845, %v1029, 0.0
    %v1075 = vadd.f32 %v1073, %v1074
    %v1076 = vsel %vm845, %v1030, 0.0
    %v1077 = vadd.f32 %v1075, %v1076
    %v1078 = vsel %vm845, %v1031, 0.0
    %v1079 = vadd.f32 %v1077, %v1078
    %v1080 = vsel %vm845, %v1032, 0.0
    %v1081 = vadd.f32 %v1079, %v1080
    %v1082 = vsel %vm845, %v1033, 0.0
    %v1083 = vadd.f32 %v1081, %v1082
    %v1084 = vsel %vm845, %v1034, 0.0
    %v1085 = vadd.f32 %v1083, %v1084
    %v1086 = vsel %vm845, %v1035, 0.0
    %v1087 = vadd.f32 %v1085, %v1086
    %v1088 = vsel %vm845, %v1036, 0.0
    %v1089 = vadd.f32 %v1087, %v1088
    %v1090 = vsel %vm845, %v1037, 0.0
    %v1091 = vadd.f32 %v1089, %v1090
    %v1092 = vsel %vm845, %v1038, 0.0
    %v1093 = vadd.f32 %v1091, %v1092
    %v1094 = vsel %vm845, %v1039, 0.0
    %v1095 = vadd.f32 %v1093, %v1094
    %v1096 = vsel %vm845, %v1040, 0.0
    %v1097 = vadd.f32 %v1095, %v1096
    %v1098 = vsel %vm845, %v1041, 0.0
    %v1099 = vadd.f32 %v1097, %v1098
    %v1100 = vsel %vm845, %v1042, 0.0
    %v1101 = vadd.f32 %v1099, %v1100
    %v1102 = vsel %vm845, %v1043, 0.0
    %v1103 = vadd.f32 %v1101, %v1102
    %v1104 = vsel %vm845, %v1044, 0.0
    %v1105 = vadd.f32 %v1103, %v1104
    %v1106 = vsel %vm845, %v1045, 0.0
    %v1107 = vadd.f32 %v1105, %v1106
    %v1108 = vsel %vm845, %v1046, 0.0
    %v1109 = vadd.f32 %v1107, %v1108
    %1110 = vadd.xlane.f32.xlu0 %v1109
    %v1111 = vpop.xlane.xlu0 %1110
    %v1112 = vadd.f32 %v1014, %v1111
    %1113 = vst.msk [vmem:[#allocation4] sm:$0xf] %vm912, %v1112
    %v1114 = vld [vmem:[#allocation5] sm:$0xf]
    %v1115 = vmul.f32 %v780, %v387
    %v1116 = vmul.f32 %v781, %v388
    %v1117 = vmul.f32 %v782, %v389
    %v1118 = vmul.f32 %v783, %v390
    %v1119 = vmul.f32 %v784, %v391
    %v1120 = vmul.f32 %v785, %v392
    %v1121 = vmul.f32 %v786, %v393
    %v1122 = vmul.f32 %v787, %v394
    %v1123 = vmul.f32 %v788, %v395
    %v1124 = vmul.f32 %v789, %v396
    %v1125 = vmul.f32 %v790, %v397
    %v1126 = vmul.f32 %v791, %v398
    %v1127 = vmul.f32 %v792, %v399
    %v1128 = vmul.f32 %v793, %v400
    %v1129 = vmul.f32 %v794, %v401
    %v1130 = vmul.f32 %v795, %v402
    %v1131 = vmul.f32 %v796, %v403
    %v1132 = vmul.f32 %v797, %v404
    %v1133 = vmul.f32 %v798, %v405
    %v1134 = vmul.f32 %v799, %v406
    %v1135 = vmul.f32 %v800, %v407
    %v1136 = vmul.f32 %v801, %v408
    %v1137 = vmul.f32 %v802, %v409
    %v1138 = vmul.f32 %v803, %v410
    %v1139 = vmul.f32 %v804, %v411
    %v1140 = vmul.f32 %v805, %v412
    %v1141 = vmul.f32 %v806, %v413
    %v1142 = vmul.f32 %v807, %v414
    %v1143 = vmul.f32 %v808, %v415
    %v1144 = vmul.f32 %v809, %v416
    %v1145 = vmul.f32 %v810, %v417
    %v1146 = vmul.f32 %v811, %v418
    %v1147 = vsel %vm845, %v1115, 0.0
    %v1148 = vsel %vm845, %v1116, 0.0
    %v1149 = vadd.f32 %v1147, %v1148
    %v1150 = vsel %vm845, %v1117, 0.0
    %v1151 = vadd.f32 %v1149, %v1150
    %v1152 = vsel %vm845, %v1118, 0.0
    %v1153 = vadd.f32 %v1151, %v1152
    %v1154 = vsel %vm845, %v1119, 0.0
    %v1155 = vadd.f32 %v1153, %v1154
    %v1156 = vsel %vm845, %v1120, 0.0
    %v1157 = vadd.f32 %v1155, %v1156
    %v1158 = vsel %vm845, %v1121, 0.0
    %v1159 = vadd.f32 %v1157, %v1158
    %v1160 = vsel %vm845, %v1122, 0.0
    %v1161 = vadd.f32 %v1159, %v1160
    %v1162 = vsel %vm845, %v1123, 0.0
    %v1163 = vadd.f32 %v1161, %v1162
    %v1164 = vsel %vm845, %v1124, 0.0
    %v1165 = vadd.f32 %v1163, %v1164
    %v1166 = vsel %vm845, %v1125, 0.0
    %v1167 = vadd.f32 %v1165, %v1166
    %v1168 = vsel %vm845, %v1126, 0.0
    %v1169 = vadd.f32 %v1167, %v1168
    %v1170 = vsel %vm845, %v1127, 0.0
    %v1171 = vadd.f32 %v1169, %v1170
    %v1172 = vsel %vm845, %v1128, 0.0
    %v1173 = vadd.f32 %v1171, %v1172
    %v1174 = vsel %vm845, %v1129, 0.0
    %v1175 = vadd.f32 %v1173, %v1174
    %v1176 = vsel %vm845, %v1130, 0.0
    %v1177 = vadd.f32 %v1175, %v1176
    %v1178 = vsel %vm845, %v1131, 0.0
    %v1179 = vadd.f32 %v1177, %v1178
    %v1180 = vsel %vm845, %v1132, 0.0
    %v1181 = vadd.f32 %v1179, %v1180
    %v1182 = vsel %vm845, %v1133, 0.0
    %v1183 = vadd.f32 %v1181, %v1182
    %v1184 = vsel %vm845, %v1134, 0.0
    %v1185 = vadd.f32 %v1183, %v1184
    %v1186 = vsel %vm845, %v1135, 0.0
    %v1187 = vadd.f32 %v1185, %v1186
    %v1188 = vsel %vm845, %v1136, 0.0
    %v1189 = vadd.f32 %v1187, %v1188
    %v1190 = vsel %vm845, %v1137, 0.0
    %v1191 = vadd.f32 %v1189, %v1190
    %v1192 = vsel %vm845, %v1138, 0.0
    %v1193 = vadd.f32 %v1191, %v1192
    %v1194 = vsel %vm845, %v1139, 0.0
    %v1195 = vadd.f32 %v1193, %v1194
    %v1196 = vsel %vm845, %v1140, 0.0
    %v1197 = vadd.f32 %v1195, %v1196
    %v1198 = vsel %vm845, %v1141, 0.0
    %v1199 = vadd.f32 %v1197, %v1198
    %v1200 = vsel %vm845, %v1142, 0.0
    %v1201 = vadd.f32 %v1199, %v1200
    %v1202 = vsel %vm845, %v1143, 0.0
    %v1203 = vadd.f32 %v1201, %v1202
    %v1204 = vsel %vm845, %v1144, 0.0
    %v1205 = vadd.f32 %v1203, %v1204
    %v1206 = vsel %vm845, %v1145, 0.0
    %v1207 = vadd.f32 %v1205, %v1206
    %v1208 = vsel %vm845, %v1146, 0.0
    %v1209 = vadd.f32 %v1207, %v1208
    %1210 = vadd.xlane.f32.xlu0 %v1209
    %v1211 = vpop.xlane.xlu0 %1210
    %v1212 = vadd.f32 %v1114, %v1211
    %1213 = vst.msk [vmem:[#allocation5] sm:$0xf] %vm912, %v1212
    %v1214 = vsub.f32 %v518, %v387
    %v1215 = vsub.f32 %v519, %v388
    %v1216 = vsub.f32 %v520, %v389
    %v1217 = vsub.f32 %v521, %v390
    %v1218 = vsub.f32 %v522, %v391
    %v1219 = vsub.f32 %v523, %v392
    %v1220 = vsub.f32 %v524, %v393
    %v1221 = vsub.f32 %v525, %v394
    %v1222 = vsub.f32 %v526, %v395
    %v1223 = vsub.f32 %v527, %v396
    %v1224 = vsub.f32 %v528, %v397
    %v1225 = vsub.f32 %v529, %v398
    %v1226 = vsub.f32 %v530, %v399
    %v1227 = vsub.f32 %v531, %v400
    %v1228 = vsub.f32 %v532, %v401
    %v1229 = vsub.f32 %v533, %v402
    %v1230 = vsub.f32 %v534, %v403
    %v1231 = vsub.f32 %v535, %v404
    %v1232 = vsub.f32 %v536, %v405
    %v1233 = vsub.f32 %v537, %v406
    %v1234 = vsub.f32 %v538, %v407
    %v1235 = vsub.f32 %v539, %v408
    %v1236 = vsub.f32 %v540, %v409
    %v1237 = vsub.f32 %v541, %v410
    %v1238 = vsub.f32 %v542, %v411
    %v1239 = vsub.f32 %v543, %v412
    %v1240 = vsub.f32 %v544, %v413
    %v1241 = vsub.f32 %v545, %v414
    %v1242 = vsub.f32 %v546, %v415
    %v1243 = vsub.f32 %v547, %v416
    %v1244 = vsub.f32 %v548, %v417
    %v1245 = vsub.f32 %v549, %v418
    %v1246 = vsub.f32 %v649, %v387
    %v1247 = vsub.f32 %v650, %v388
    %v1248 = vsub.f32 %v651, %v389
    %v1249 = vsub.f32 %v652, %v390
    %v1250 = vsub.f32 %v653, %v391
    %v1251 = vsub.f32 %v654, %v392
    %v1252 = vsub.f32 %v655, %v393
    %v1253 = vsub.f32 %v656, %v394
    %v1254 = vsub.f32 %v657, %v395
    %v1255 = vsub.f32 %v658, %v396
    %v1256 = vsub.f32 %v659, %v397
    %v1257 = vsub.f32 %v660, %v398
    %v1258 = vsub.f32 %v661, %v399
    %v1259 = vsub.f32 %v662, %v400
    %v1260 = vsub.f32 %v663, %v401
    %v1261 = vsub.f32 %v664, %v402
    %v1262 = vsub.f32 %v665, %v403
    %v1263 = vsub.f32 %v666, %v404
    %v1264 = vsub.f32 %v667, %v405
    %v1265 = vsub.f32 %v668, %v406
    %v1266 = vsub.f32 %v669, %v407
    %v1267 = vsub.f32 %v670, %v408
    %v1268 = vsub.f32 %v671, %v409
    %v1269 = vsub.f32 %v672, %v410
    %v1270 = vsub.f32 %v673, %v411
    %v1271 = vsub.f32 %v674, %v412
    %v1272 = vsub.f32 %v675, %v413
    %v1273 = vsub.f32 %v676, %v414
    %v1274 = vsub.f32 %v677, %v415
    %v1275 = vsub.f32 %v678, %v416
    %v1276 = vsub.f32 %v679, %v417
    %v1277 = vsub.f32 %v680, %v418
    %v1278 = vsub.f32 %v780, %v387
    %v1279 = vsub.f32 %v781, %v388
    %v1280 = vsub.f32 %v782, %v389
    %v1281 = vsub.f32 %v783, %v390
    %v1282 = vsub.f32 %v784, %v391
    %v1283 = vsub.f32 %v785, %v392
    %v1284 = vsub.f32 %v786, %v393
    %v1285 = vsub.f32 %v787, %v394
    %v1286 = vsub.f32 %v788, %v395
    %v1287 = vsub.f32 %v789, %v396
    %v1288 = vsub.f32 %v790, %v397
    %v1289 = vsub.f32 %v791, %v398
    %v1290 = vsub.f32 %v792, %v399
    %v1291 = vsub.f32 %v793, %v400
    %v1292 = vsub.f32 %v794, %v401
    %v1293 = vsub.f32 %v795, %v402
    %v1294 = vsub.f32 %v796, %v403
    %v1295 = vsub.f32 %v797, %v404
    %v1296 = vsub.f32 %v798, %v405
    %v1297 = vsub.f32 %v799, %v406
    %v1298 = vsub.f32 %v800, %v407
    %v1299 = vsub.f32 %v801, %v408
    %v1300 = vsub.f32 %v802, %v409
    %v1301 = vsub.f32 %v803, %v410
    %v1302 = vsub.f32 %v804, %v411
    %v1303 = vsub.f32 %v805, %v412
    %v1304 = vsub.f32 %v806, %v413
    %v1305 = vsub.f32 %v807, %v414
    %v1306 = vsub.f32 %v808, %v415
    %v1307 = vsub.f32 %v809, %v416
    %v1308 = vsub.f32 %v810, %v417
    %v1309 = vsub.f32 %v811, %v418
    %v1310 = vld [vmem:[#allocation6] sm:$0xf]
    %v1311 = vmul.f32 %v1214, %v1214
    %v1312 = vmul.f32 %v1215, %v1215
    %v1313 = vmul.f32 %v1216, %v1216
    %v1314 = vmul.f32 %v1217, %v1217
    %v1315 = vmul.f32 %v1218, %v1218
    %v1316 = vmul.f32 %v1219, %v1219
    %v1317 = vmul.f32 %v1220, %v1220
    %v1318 = vmul.f32 %v1221, %v1221
    %v1319 = vmul.f32 %v1222, %v1222
    %v1320 = vmul.f32 %v1223, %v1223
    %v1321 = vmul.f32 %v1224, %v1224
    %v1322 = vmul.f32 %v1225, %v1225
    %v1323 = vmul.f32 %v1226, %v1226
    %v1324 = vmul.f32 %v1227, %v1227
    %v1325 = vmul.f32 %v1228, %v1228
    %v1326 = vmul.f32 %v1229, %v1229
    %v1327 = vmul.f32 %v1230, %v1230
    %v1328 = vmul.f32 %v1231, %v1231
    %v1329 = vmul.f32 %v1232, %v1232
    %v1330 = vmul.f32 %v1233, %v1233
    %v1331 = vmul.f32 %v1234, %v1234
    %v1332 = vmul.f32 %v1235, %v1235
    %v1333 = vmul.f32 %v1236, %v1236
    %v1334 = vmul.f32 %v1237, %v1237
    %v1335 = vmul.f32 %v1238, %v1238
    %v1336 = vmul.f32 %v1239, %v1239
    %v1337 = vmul.f32 %v1240, %v1240
    %v1338 = vmul.f32 %v1241, %v1241
    %v1339 = vmul.f32 %v1242, %v1242
    %v1340 = vmul.f32 %v1243, %v1243
    %v1341 = vmul.f32 %v1244, %v1244
    %v1342 = vmul.f32 %v1245, %v1245
    %v1343 = vsel %vm845, %v1311, 0.0
    %v1344 = vsel %vm845, %v1312, 0.0
    %v1345 = vadd.f32 %v1343, %v1344
    %v1346 = vsel %vm845, %v1313, 0.0
    %v1347 = vadd.f32 %v1345, %v1346
    %v1348 = vsel %vm845, %v1314, 0.0
    %v1349 = vadd.f32 %v1347, %v1348
    %v1350 = vsel %vm845, %v1315, 0.0
    %v1351 = vadd.f32 %v1349, %v1350
    %v1352 = vsel %vm845, %v1316, 0.0
    %v1353 = vadd.f32 %v1351, %v1352
    %v1354 = vsel %vm845, %v1317, 0.0
    %v1355 = vadd.f32 %v1353, %v1354
    %v1356 = vsel %vm845, %v1318, 0.0
    %v1357 = vadd.f32 %v1355, %v1356
    %v1358 = vsel %vm845, %v1319, 0.0
    %v1359 = vadd.f32 %v1357, %v1358
    %v1360 = vsel %vm845, %v1320, 0.0
    %v1361 = vadd.f32 %v1359, %v1360
    %v1362 = vsel %vm845, %v1321, 0.0
    %v1363 = vadd.f32 %v1361, %v1362
    %v1364 = vsel %vm845, %v1322, 0.0
    %v1365 = vadd.f32 %v1363, %v1364
    %v1366 = vsel %vm845, %v1323, 0.0
    %v1367 = vadd.f32 %v1365, %v1366
    %v1368 = vsel %vm845, %v1324, 0.0
    %v1369 = vadd.f32 %v1367, %v1368
    %v1370 = vsel %vm845, %v1325, 0.0
    %v1371 = vadd.f32 %v1369, %v1370
    %v1372 = vsel %vm845, %v1326, 0.0
    %v1373 = vadd.f32 %v1371, %v1372
    %v1374 = vsel %vm845, %v1327, 0.0
    %v1375 = vadd.f32 %v1373, %v1374
    %v1376 = vsel %vm845, %v1328, 0.0
    %v1377 = vadd.f32 %v1375, %v1376
    %v1378 = vsel %vm845, %v1329, 0.0
    %v1379 = vadd.f32 %v1377, %v1378
    %v1380 = vsel %vm845, %v1330, 0.0
    %v1381 = vadd.f32 %v1379, %v1380
    %v1382 = vsel %vm845, %v1331, 0.0
    %v1383 = vadd.f32 %v1381, %v1382
    %v1384 = vsel %vm845, %v1332, 0.0
    %v1385 = vadd.f32 %v1383, %v1384
    %v1386 = vsel %vm845, %v1333, 0.0
    %v1387 = vadd.f32 %v1385, %v1386
    %v1388 = vsel %vm845, %v1334, 0.0
    %v1389 = vadd.f32 %v1387, %v1388
    %v1390 = vsel %vm845, %v1335, 0.0
    %v1391 = vadd.f32 %v1389, %v1390
    %v1392 = vsel %vm845, %v1336, 0.0
    %v1393 = vadd.f32 %v1391, %v1392
    %v1394 = vsel %vm845, %v1337, 0.0
    %v1395 = vadd.f32 %v1393, %v1394
    %v1396 = vsel %vm845, %v1338, 0.0
    %v1397 = vadd.f32 %v1395, %v1396
    %v1398 = vsel %vm845, %v1339, 0.0
    %v1399 = vadd.f32 %v1397, %v1398
    %v1400 = vsel %vm845, %v1340, 0.0
    %v1401 = vadd.f32 %v1399, %v1400
    %v1402 = vsel %vm845, %v1341, 0.0
    %v1403 = vadd.f32 %v1401, %v1402
    %v1404 = vsel %vm845, %v1342, 0.0
    %v1405 = vadd.f32 %v1403, %v1404
    %1406 = vadd.xlane.f32.xlu0 %v1405
    %v1407 = vpop.xlane.xlu0 %1406
    %v1408 = vadd.f32 %v1310, %v1407
    %1409 = vst.msk [vmem:[#allocation6] sm:$0xf] %vm912, %v1408
    %v1410 = vld [vmem:[#allocation7] sm:$0xf]
    %v1411 = vmul.f32 %v1246, %v1246
    %v1412 = vmul.f32 %v1247, %v1247
    %v1413 = vmul.f32 %v1248, %v1248
    %v1414 = vmul.f32 %v1249, %v1249
    %v1415 = vmul.f32 %v1250, %v1250
    %v1416 = vmul.f32 %v1251, %v1251
    %v1417 = vmul.f32 %v1252, %v1252
    %v1418 = vmul.f32 %v1253, %v1253
    %v1419 = vmul.f32 %v1254, %v1254
    %v1420 = vmul.f32 %v1255, %v1255
    %v1421 = vmul.f32 %v1256, %v1256
    %v1422 = vmul.f32 %v1257, %v1257
    %v1423 = vmul.f32 %v1258, %v1258
    %v1424 = vmul.f32 %v1259, %v1259
    %v1425 = vmul.f32 %v1260, %v1260
    %v1426 = vmul.f32 %v1261, %v1261
    %v1427 = vmul.f32 %v1262, %v1262
    %v1428 = vmul.f32 %v1263, %v1263
    %v1429 = vmul.f32 %v1264, %v1264
    %v1430 = vmul.f32 %v1265, %v1265
    %v1431 = vmul.f32 %v1266, %v1266
    %v1432 = vmul.f32 %v1267, %v1267
    %v1433 = vmul.f32 %v1268, %v1268
    %v1434 = vmul.f32 %v1269, %v1269
    %v1435 = vmul.f32 %v1270, %v1270
    %v1436 = vmul.f32 %v1271, %v1271
    %v1437 = vmul.f32 %v1272, %v1272
    %v1438 = vmul.f32 %v1273, %v1273
    %v1439 = vmul.f32 %v1274, %v1274
    %v1440 = vmul.f32 %v1275, %v1275
    %v1441 = vmul.f32 %v1276, %v1276
    %v1442 = vmul.f32 %v1277, %v1277
    %v1443 = vsel %vm845, %v1411, 0.0
    %v1444 = vsel %vm845, %v1412, 0.0
    %v1445 = vadd.f32 %v1443, %v1444
    %v1446 = vsel %vm845, %v1413, 0.0
    %v1447 = vadd.f32 %v1445, %v1446
    %v1448 = vsel %vm845, %v1414, 0.0
    %v1449 = vadd.f32 %v1447, %v1448
    %v1450 = vsel %vm845, %v1415, 0.0
    %v1451 = vadd.f32 %v1449, %v1450
    %v1452 = vsel %vm845, %v1416, 0.0
    %v1453 = vadd.f32 %v1451, %v1452
    %v1454 = vsel %vm845, %v1417, 0.0
    %v1455 = vadd.f32 %v1453, %v1454
    %v1456 = vsel %vm845, %v1418, 0.0
    %v1457 = vadd.f32 %v1455, %v1456
    %v1458 = vsel %vm845, %v1419, 0.0
    %v1459 = vadd.f32 %v1457, %v1458
    %v1460 = vsel %vm845, %v1420, 0.0
    %v1461 = vadd.f32 %v1459, %v1460
    %v1462 = vsel %vm845, %v1421, 0.0
    %v1463 = vadd.f32 %v1461, %v1462
    %v1464 = vsel %vm845, %v1422, 0.0
    %v1465 = vadd.f32 %v1463, %v1464
    %v1466 = vsel %vm845, %v1423, 0.0
    %v1467 = vadd.f32 %v1465, %v1466
    %v1468 = vsel %vm845, %v1424, 0.0
    %v1469 = vadd.f32 %v1467, %v1468
    %v1470 = vsel %vm845, %v1425, 0.0
    %v1471 = vadd.f32 %v1469, %v1470
    %v1472 = vsel %vm845, %v1426, 0.0
    %v1473 = vadd.f32 %v1471, %v1472
    %v1474 = vsel %vm845, %v1427, 0.0
    %v1475 = vadd.f32 %v1473, %v1474
    %v1476 = vsel %vm845, %v1428, 0.0
    %v1477 = vadd.f32 %v1475, %v1476
    %v1478 = vsel %vm845, %v1429, 0.0
    %v1479 = vadd.f32 %v1477, %v1478
    %v1480 = vsel %vm845, %v1430, 0.0
    %v1481 = vadd.f32 %v1479, %v1480
    %v1482 = vsel %vm845, %v1431, 0.0
    %v1483 = vadd.f32 %v1481, %v1482
    %v1484 = vsel %vm845, %v1432, 0.0
    %v1485 = vadd.f32 %v1483, %v1484
    %v1486 = vsel %vm845, %v1433, 0.0
    %v1487 = vadd.f32 %v1485, %v1486
    %v1488 = vsel %vm845, %v1434, 0.0
    %v1489 = vadd.f32 %v1487, %v1488
    %v1490 = vsel %vm845, %v1435, 0.0
    %v1491 = vadd.f32 %v1489, %v1490
    %v1492 = vsel %vm845, %v1436, 0.0
    %v1493 = vadd.f32 %v1491, %v1492
    %v1494 = vsel %vm845, %v1437, 0.0
    %v1495 = vadd.f32 %v1493, %v1494
    %v1496 = vsel %vm845, %v1438, 0.0
    %v1497 = vadd.f32 %v1495, %v1496
    %v1498 = vsel %vm845, %v1439, 0.0
    %v1499 = vadd.f32 %v1497, %v1498
    %v1500 = vsel %vm845, %v1440, 0.0
    %v1501 = vadd.f32 %v1499, %v1500
    %v1502 = vsel %vm845, %v1441, 0.0
    %v1503 = vadd.f32 %v1501, %v1502
    %v1504 = vsel %vm845, %v1442, 0.0
    %v1505 = vadd.f32 %v1503, %v1504
    %1506 = vadd.xlane.f32.xlu0 %v1505
    %v1507 = vpop.xlane.xlu0 %1506
    %v1508 = vadd.f32 %v1410, %v1507
    %1509 = vst.msk [vmem:[#allocation7] sm:$0xf] %vm912, %v1508
    %v1510 = vld [vmem:[#allocation8] sm:$0xf]
    %v1511 = vmul.f32 %v1278, %v1278
    %v1512 = vmul.f32 %v1279, %v1279
    %v1513 = vmul.f32 %v1280, %v1280
    %v1514 = vmul.f32 %v1281, %v1281
    %v1515 = vmul.f32 %v1282, %v1282
    %v1516 = vmul.f32 %v1283, %v1283
    %v1517 = vmul.f32 %v1284, %v1284
    %v1518 = vmul.f32 %v1285, %v1285
    %v1519 = vmul.f32 %v1286, %v1286
    %v1520 = vmul.f32 %v1287, %v1287
    %v1521 = vmul.f32 %v1288, %v1288
    %v1522 = vmul.f32 %v1289, %v1289
    %v1523 = vmul.f32 %v1290, %v1290
    %v1524 = vmul.f32 %v1291, %v1291
    %v1525 = vmul.f32 %v1292, %v1292
    %v1526 = vmul.f32 %v1293, %v1293
    %v1527 = vmul.f32 %v1294, %v1294
    %v1528 = vmul.f32 %v1295, %v1295
    %v1529 = vmul.f32 %v1296, %v1296
    %v1530 = vmul.f32 %v1297, %v1297
    %v1531 = vmul.f32 %v1298, %v1298
    %v1532 = vmul.f32 %v1299, %v1299
    %v1533 = vmul.f32 %v1300, %v1300
    %v1534 = vmul.f32 %v1301, %v1301
    %v1535 = vmul.f32 %v1302, %v1302
    %v1536 = vmul.f32 %v1303, %v1303
    %v1537 = vmul.f32 %v1304, %v1304
    %v1538 = vmul.f32 %v1305, %v1305
    %v1539 = vmul.f32 %v1306, %v1306
    %v1540 = vmul.f32 %v1307, %v1307
    %v1541 = vmul.f32 %v1308, %v1308
    %v1542 = vmul.f32 %v1309, %v1309
    %v1543 = vsel %vm845, %v1511, 0.0
    %v1544 = vsel %vm845, %v1512, 0.0
    %v1545 = vadd.f32 %v1543, %v1544
    %v1546 = vsel %vm845, %v1513, 0.0
    %v1547 = vadd.f32 %v1545, %v1546
    %v1548 = vsel %vm845, %v1514, 0.0
    %v1549 = vadd.f32 %v1547, %v1548
    %v1550 = vsel %vm845, %v1515, 0.0
    %v1551 = vadd.f32 %v1549, %v1550
    %v1552 = vsel %vm845, %v1516, 0.0
    %v1553 = vadd.f32 %v1551, %v1552
    %v1554 = vsel %vm845, %v1517, 0.0
    %v1555 = vadd.f32 %v1553, %v1554
    %v1556 = vsel %vm845, %v1518, 0.0
    %v1557 = vadd.f32 %v1555, %v1556
    %v1558 = vsel %vm845, %v1519, 0.0
    %v1559 = vadd.f32 %v1557, %v1558
    %v1560 = vsel %vm845, %v1520, 0.0
    %v1561 = vadd.f32 %v1559, %v1560
    %v1562 = vsel %vm845, %v1521, 0.0
    %v1563 = vadd.f32 %v1561, %v1562
    %v1564 = vsel %vm845, %v1522, 0.0
    %v1565 = vadd.f32 %v1563, %v1564
    %v1566 = vsel %vm845, %v1523, 0.0
    %v1567 = vadd.f32 %v1565, %v1566
    %v1568 = vsel %vm845, %v1524, 0.0
    %v1569 = vadd.f32 %v1567, %v1568
    %v1570 = vsel %vm845, %v1525, 0.0
    %v1571 = vadd.f32 %v1569, %v1570
    %v1572 = vsel %vm845, %v1526, 0.0
    %v1573 = vadd.f32 %v1571, %v1572
    %v1574 = vsel %vm845, %v1527, 0.0
    %v1575 = vadd.f32 %v1573, %v1574
    %v1576 = vsel %vm845, %v1528, 0.0
    %v1577 = vadd.f32 %v1575, %v1576
    %v1578 = vsel %vm845, %v1529, 0.0
    %v1579 = vadd.f32 %v1577, %v1578
    %v1580 = vsel %vm845, %v1530, 0.0
    %v1581 = vadd.f32 %v1579, %v1580
    %v1582 = vsel %vm845, %v1531, 0.0
    %v1583 = vadd.f32 %v1581, %v1582
    %v1584 = vsel %vm845, %v1532, 0.0
    %v1585 = vadd.f32 %v1583, %v1584
    %v1586 = vsel %vm845, %v1533, 0.0
    %v1587 = vadd.f32 %v1585, %v1586
    %v1588 = vsel %vm845, %v1534, 0.0
    %v1589 = vadd.f32 %v1587, %v1588
    %v1590 = vsel %vm845, %v1535, 0.0
    %v1591 = vadd.f32 %v1589, %v1590
    %v1592 = vsel %vm845, %v1536, 0.0
    %v1593 = vadd.f32 %v1591, %v1592
    %v1594 = vsel %vm845, %v1537, 0.0
    %v1595 = vadd.f32 %v1593, %v1594
    %v1596 = vsel %vm845, %v1538, 0.0
    %v1597 = vadd.f32 %v1595, %v1596
    %v1598 = vsel %vm845, %v1539, 0.0
    %v1599 = vadd.f32 %v1597, %v1598
    %v1600 = vsel %vm845, %v1540, 0.0
    %v1601 = vadd.f32 %v1599, %v1600
    %v1602 = vsel %vm845, %v1541, 0.0
    %v1603 = vadd.f32 %v1601, %v1602
    %v1604 = vsel %vm845, %v1542, 0.0
    %v1605 = vadd.f32 %v1603, %v1604
    %1606 = vadd.xlane.f32.xlu0 %v1605
    %v1607 = vpop.xlane.xlu0 %1606
    %v1608 = vadd.f32 %v1510, %v1607
    %1609 = vst.msk [vmem:[#allocation8] sm:$0xf] %vm912, %v1608
    // Predicated region
    $region38: #{spex_plus_loss.1} parent=1 // pred_check
      %p1610 = pneg %p112
    $region39: #{spex_plus_loss.1} parent=1 // pred_check_branch
      %1612 = sbr.rel (%p1610) target = $region41
    $region40: #{spex_plus_loss.1} parent=1 // pred_region
      %v1613 = vld [vmem:[#allocation2] sm:$0xf]
      %1614 = vst.msk [vmem:[%s4] sm:$0xf] %vm912, %v1613
      %v1615 = vld [vmem:[#allocation3] sm:$0xf]
      %1617 = vrot.lane.b32.xlu0 %v1615, 1
      %v1618 = vpop.permute.xlu0 %1617
      %vm1620 = vcmask 11272
      %1621 = vst.msk [vmem:[%s4] sm:$0xf] %vm1620, %v1618
      %v1622 = vld [vmem:[#allocation4] sm:$0xf]
      %1624 = vrot.lane.b32.xlu0 %v1622, 2
      %v1625 = vpop.permute.xlu0 %1624
      %vm1627 = vcmask 19472
      %1628 = vst.msk [vmem:[%s4] sm:$0xf] %vm1627, %v1625
      %v1629 = vld [vmem:[#allocation5] sm:$0xf]
      %1631 = vrot.lane.b32.xlu0 %v1629, 3
      %v1632 = vpop.permute.xlu0 %1631
      %vm1634 = vcmask 27672
      %1635 = vst.msk [vmem:[%s4] sm:$0xf] %vm1634, %v1632
      %v1636 = vld [vmem:[#allocation6] sm:$0xf]
      %1638 = vrot.lane.b32.xlu0 %v1636, 4
      %v1639 = vpop.permute.xlu0 %1638
      %vm1641 = vcmask 35872
      %1642 = vst.msk [vmem:[%s4] sm:$0xf] %vm1641, %v1639
      %v1643 = vld [vmem:[#allocation7] sm:$0xf]
      %1645 = vrot.lane.b32.xlu0 %v1643, 5
      %v1646 = vpop.permute.xlu0 %1645
      %vm1648 = vcmask 44072
      %1649 = vst.msk [vmem:[%s4] sm:$0xf] %vm1648, %v1646
      %v1650 = vld [vmem:[#allocation8] sm:$0xf]
      %1652 = vrot.lane.b32.xlu0 %v1650, 6
      %v1653 = vpop.permute.xlu0 %1652
      %vm1655 = vcmask 52272
      %1656 = vst.msk [vmem:[%s4] sm:$0xf] %vm1655, %v1653
    $region41: #{spex_plus_loss.1} parent=1 // pred_fallthru
      _
    // Predicated region
    $region42: #{spex_plus_loss.1} parent=1 // pred_check
      _
    $region43: #{spex_plus_loss.1} parent=1 // pred_check_branch
      %1658 = sbr.rel (0) target = $region45
    $region44: #{spex_plus_loss.1} parent=1 // pred_region
      _
    $region45: #{spex_plus_loss.1} parent=1 // pred_fallthru
      _
    // Predicated region
    $region46: #{spex_plus_loss.1} parent=1 // pred_check
      _
    $region47: #{spex_plus_loss.1} parent=1 // pred_check_branch
      %1660 = sbr.rel (0) target = $region49
    $region48: #{spex_plus_loss.1} parent=1 // pred_region
      _
    $region49: #{spex_plus_loss.1} parent=1 // pred_fallthru
      _
    %1661 = vsyncpa [#allocation10], 1
    %1662 = vsyncpa [#allocation12], 1
    %1663 = vsyncpa [#allocation15], 1

</llo_original>
